<compile_context>
chip_gen: v7x
topology: tpu7x:2x2x1
jax: 0.10.0
libtpu: 0.0.40
codegen_flags: <defaults>
</compile_context>

<pallas_src>
import functools

import jax
import jax.numpy as jnp
from jax.experimental import pallas as pl
from jax.experimental.pallas import tpu as pltpu


# -----------------------------------------------------------------------------
# Pallas kernel: layer-sequential multi-layer LSTM + head in one invocation.
# -----------------------------------------------------------------------------
def _eiie_critic_kernel(x_ref, w_ref, hv_ref, hs_ref, out_ref, *, batch, seq_len):
    B, T = batch, seq_len
    L, WR, G = w_ref.shape            # (layers, Fp + H weight rows, 4H gate cols)
    H = G // 4
    Fp = WR - H

    hv = hv_ref[...]                  # (3 + B + L, C) packed head / bias tensor

    # -------- stacked LSTM, layer-sequential schedule --------
    seq = x_ref[...]                  # (T*B, Fp), row order t*B + b
    h = jnp.zeros((B, H), jnp.float32)
    for l in range(L):
        w_l = w_ref[l]                # (Fp + H, 4H), loaded once per layer
        w_ih = w_l[:Fp, :]            # (Fp, 4H); rows past the real fan-in are 0
        w_hh = w_l[Fp:, :]            # (H, 4H)
        bias = hv[3 + B + l:4 + B + l, :G]          # (1, 4H) = b_ih + b_hh

        # Non-recurrent half for ALL timesteps: one batched MXU dot + bias.
        xg = jnp.dot(seq, w_ih, preferred_element_type=jnp.float32) + bias  # (T*B, 4H)

        h = jnp.zeros((B, H), jnp.float32)
        c = jnp.zeros((B, H), jnp.float32)
        outs = []
        for t in range(T):            # strictly serial recurrence
            g = xg[t * B:(t + 1) * B, :] + jnp.dot(
                h, w_hh, preferred_element_type=jnp.float32)      # (B, 4H)
            sig = jax.nn.sigmoid(g)   # full-width: 1 EUP pass
            th = jnp.tanh(g)          # full-width: 1 EUP pass
            i_g = sig[:, 0 * H:1 * H]
            f_g = sig[:, 1 * H:2 * H]
            g_g = th[:, 2 * H:3 * H]
            o_g = sig[:, 3 * H:4 * H]
            c = f_g * c + i_g * g_g
            h = o_g * jnp.tanh(c)
            if l < L - 1:
                outs.append(h)
        if l < L - 1:
            nxt = jnp.concatenate(outs, axis=0)     # (T*B, H), same row order
            if H < Fp:                # fan-in pad (matching zero weight rows)
                nxt = jnp.concatenate(
                    [nxt, jnp.zeros((T * B, Fp - H), jnp.float32)], axis=-1)
            seq = nxt

    h_last = h                        # lstm_out[:, -1, :]  -> (B, H)

    # -------- head: linear -> conv1d(1,1,1) -> relu(cat) -> linear2 --------
    w_lin = hv[0:1, :H]               # (1, H)   linear weight
    w2_ap = hv[1:2, :]                # (1, C)   linear2 weights for [a ; para], 0-padded
    ap_row = hv[2:3, :]               # (1, C)   [a ; para] values, 0-padded
    w2_x = hv[3:3 + B, 0:1]           # (B, 1)   linear2 weights for conv output

    b_lin = hs_ref[0]                 # SMEM scalars
    conv_w = hs_ref[1]
    conv_b = hs_ref[2]
    b2 = hs_ref[3]

    lin = jnp.sum(h_last * w_lin, axis=1, keepdims=True) + b_lin    # (B, 1)
    conv = conv_w * lin + conv_b                                    # Conv1d(1,1,k=1)
    x_relu = jnp.maximum(conv, 0.0)                                 # (B, 1)
    ap_relu = jnp.maximum(ap_row, 0.0)                              # relu([a ; para])

    term_x = jnp.sum(x_relu * w2_x, axis=0, keepdims=True)          # (1, 1)
    term_ap = jnp.sum(ap_relu * w2_ap, axis=1, keepdims=True)       # (1, 1)
    out_ref[...] = term_x + term_ap + b2


# -----------------------------------------------------------------------------
# Wrapper (single pallas_call, no grid, everything resident in VMEM/SMEM)
# -----------------------------------------------------------------------------
def eiie_critic_forward(x, a, kparams):
    B, T, F = x.shape
    A = a.shape[0]
    Fp = kparams["Fp"]

    # One-time layout plumbing outside the kernel: (B,T,F) -> (T*B, Fp).
    x32 = jnp.transpose(x.astype(jnp.float32), (1, 0, 2))           # (T, B, F)
    if Fp > F:
        x32 = jnp.pad(x32, ((0, 0), (0, 0), (0, Fp - F)))
    x_flat = x32.reshape(T * B, Fp)

    # Fold the action vector into the packed head tensor (one fewer entry DMA).
    headv = kparams["headv"].at[2, :A].set(a.astype(jnp.float32))

    vmem = pl.BlockSpec(memory_space=pltpu.MemorySpace.VMEM)
    smem = pl.BlockSpec(memory_space=pltpu.MemorySpace.SMEM)

    out = pl.pallas_call(
        functools.partial(_eiie_critic_kernel, batch=B, seq_len=T),
        out_shape=jax.ShapeDtypeStruct((1, 1), jnp.float32),
        in_specs=[vmem, vmem, vmem, smem],
        out_specs=vmem,
    )(x_flat, kparams["w_pack"], headv, kparams["head_scalars"])
    return out.reshape(-1)            # shape (1,), like the PyTorch module


# -----------------------------------------------------------------------------
# Deterministic parameter construction (mirrors the PyTorch module shapes)
# -----------------------------------------------------------------------------
def make_params(key, n_features, n_layers, n_hidden, batch, n_actions):
    H, F, L, B, A = n_hidden, n_features, n_layers, batch, n_actions
    keys = iter(jax.random.split(key, 4 * L + 8))

    def unif(k, shape, bound):
        return jax.random.uniform(k, shape, jnp.float32, -bound, bound)

    kb = 1.0 / jnp.sqrt(H)
    Fp = max(H, ((F + 7) // 8) * 8)   # sublane-aligned fan-in width

    raw = {"lstm": []}
    w_pack = jnp.zeros((L, Fp + H, 4 * H), jnp.float32)
    biases = jnp.zeros((L, 4 * H), jnp.float32)
    for l in range(L):
        fin = F if l == 0 else H
        w_ih = unif(next(keys), (4 * H, fin), kb)
        w_hh = unif(next(keys), (4 * H, H), kb)
        b_ih = unif(next(keys), (4 * H,), kb)
        b_hh = unif(next(keys), (4 * H,), kb)
        raw["lstm"].append((w_ih, w_hh, b_ih, b_hh))
        w_pack = w_pack.at[l, :fin, :].set(w_ih.T)       # input-proj rows
        w_pack = w_pack.at[l, Fp:Fp + H, :].set(w_hh.T)  # recurrent rows
        biases = biases.at[l].set(b_ih + b_hh)

    w_lin = unif(next(keys), (1, H), kb)
    b_lin = unif(next(keys), (1,), kb)
    conv_w = unif(next(keys), (1, 1, 1), 1.0)
    conv_b = unif(next(keys), (1,), 1.0)
    para = jnp.ones((1,), jnp.float32)

    n_nodes = B + 1 + A
    k2 = 1.0 / jnp.sqrt(n_nodes)
    w2 = unif(next(keys), (1, n_nodes), k2)
    b2 = unif(next(keys), (1,), k2)

    raw.update(w_lin=w_lin, b_lin=b_lin, conv_w=conv_w, conv_b=conv_b,
               para=para, w2=w2, b2=b2)

    # Packed head tensor: w_lin / linear2 rows / para / LSTM biases in one tile.
    C = ((max(4 * H, A + 1) + 127) // 128) * 128
    headv = jnp.zeros((3 + B + L, C), jnp.float32)
    headv = headv.at[0, :H].set(w_lin[0])                 # linear weight
    headv = headv.at[1, :A].set(w2[0, B + 1:])            # linear2 weights for `a`
    headv = headv.at[1, A].set(w2[0, B])                  # linear2 weight for `para`
    headv = headv.at[2, A].set(para[0])                   # para (row [:A] filled with `a` at call)
    headv = headv.at[3:3 + B, 0].set(w2[0, :B])           # linear2 weights for conv output
    headv = headv.at[3 + B:3 + B + L, :4 * H].set(biases)  # per-layer b_ih + b_hh

    head_scalars = jnp.array(
        [b_lin[0], conv_w[0, 0, 0], conv_b[0], b2[0]], jnp.float32)

    kparams = {"Fp": Fp, "n_hidden": H, "n_layers": L,
               "w_pack": w_pack, "headv": headv, "head_scalars": head_scalars}
    return raw, kparams


# -----------------------------------------------------------------------------
# Pure-JAX reference (mirrors the PyTorch forward exactly)
# -----------------------------------------------------------------------------
def reference_forward(x, a, raw, n_layers, n_hidden):
    B, T, F = x.shape
    H = n_hidden
    seq = x
    for l in range(n_layers):
        w_ih, w_hh, b_ih, b_hh = raw["lstm"][l]
        h = jnp.zeros((B, H), jnp.float32)
        c = jnp.zeros((B, H), jnp.float32)
        outs = []
        for t in range(T):
            g = seq[:, t, :] @ w_ih.T + b_ih + h @ w_hh.T + b_hh
            i = jax.nn.sigmoid(g[:, 0 * H:1 * H])
            f = jax.nn.sigmoid(g[:, 1 * H:2 * H])
            gg = jnp.tanh(g[:, 2 * H:3 * H])
            o = jax.nn.sigmoid(g[:, 3 * H:4 * H])
            c = f * c + i * gg
            h = o * jnp.tanh(c)
            outs.append(h)
        seq = jnp.stack(outs, axis=1)
    h_last = seq[:, -1, :]
    lin = h_last @ raw["w_lin"].T + raw["b_lin"]            # (B, 1)
    conv = raw["conv_w"][0, 0, 0] * lin + raw["conv_b"][0]  # Conv1d(1,1,1)
    flat = conv.reshape(-1)
    cat = jnp.concatenate([flat, raw["para"], a])
    r = jnp.maximum(cat, 0.0)
    return r @ raw["w2"].T + raw["b2"]                      # (1,)


if __name__ == "__main__":
    B, T, F, H, L, A = 2, 8, 4, 32, 2, 5   # batch, seq, n_features, n_hidden, layers, len(a)

    key = jax.random.PRNGKey(0)
    kx, ka, kp = jax.random.split(key, 3)
    x = jax.random.normal(kx, (B, T, F), jnp.float32)
    a = jax.random.normal(ka, (A,), jnp.float32)
    raw, kparams = make_params(kp, F, L, H, B, A)

    out = jax.block_until_ready(eiie_critic_forward(x, a, kparams))

    ref = reference_forward(x, a, raw, L, H)
    assert out.shape == (1,)
    assert jnp.allclose(out, ref, rtol=5e-3, atol=5e-3), (out, ref)

    print("KERNEL_OK")
</pallas_src>

<mosaic_0001>
module attributes {stable_mosaic.version = 11 : i64} {
  func.func @_eiie_critic_kernel(%arg0: memref<16x32xf32, #tpu.memory_space<vmem>>, %arg1: memref<2x64x128xf32, #tpu.memory_space<vmem>>, %arg2: memref<7x128xf32, #tpu.memory_space<vmem>>, %arg3: memref<4xf32, #tpu.memory_space<smem>>, %arg4: memref<1x1xf32, #tpu.memory_space<vmem>>) attributes {dimension_semantics = [], scalar_prefetch = 0 : i64, scratch_operands = 0 : i64, tpu.core_type = #tpu.core_type<tc>} {
    %c0 = arith.constant 0 : index
    %c0_0 = arith.constant 0 : index
    %0 = vector.load %arg2[%c0, %c0_0] : memref<7x128xf32, #tpu.memory_space<vmem>>, vector<7x128xf32>
    %c0_1 = arith.constant 0 : index
    %c0_2 = arith.constant 0 : index
    %1 = vector.load %arg0[%c0_1, %c0_2] : memref<16x32xf32, #tpu.memory_space<vmem>>, vector<16x32xf32>
    %c0_3 = arith.constant 0 : index
    %c0_4 = arith.constant 0 : index
    %c0_5 = arith.constant 0 : index
    %2 = vector.load %arg1[%c0_3, %c0_4, %c0_5] : memref<2x64x128xf32, #tpu.memory_space<vmem>>, vector<1x64x128xf32>
    %3 = vector.shape_cast %2 : vector<1x64x128xf32> to vector<64x128xf32>
    %4 = vector.extract_strided_slice %3 {offsets = [0, 0], sizes = [32, 128], strides = [1, 1]} : vector<64x128xf32> to vector<32x128xf32>
    %5 = vector.extract_strided_slice %3 {offsets = [32, 0], sizes = [32, 128], strides = [1, 1]} : vector<64x128xf32> to vector<32x128xf32>
    %6 = vector.extract_strided_slice %0 {offsets = [5, 0], sizes = [1, 128], strides = [1, 1]} : vector<7x128xf32> to vector<1x128xf32>
    %cst = arith.constant dense<0.000000e+00> : vector<16x128xf32>
    %7 = tpu.matmul %1, %4, %cst {dimension_numbers = #tpu.dot_dimension_numbers<[1], [0], [0], [1], [0, 0, 1, 1], [], []>} : vector<16x32xf32>, vector<32x128xf32>, vector<16x128xf32> -> vector<16x128xf32>
    %8 = vector.broadcast %6 : vector<1x128xf32> to vector<16x128xf32>
    %9 = arith.addf %7, %8 : vector<16x128xf32>
    %cst_6 = arith.constant 0.000000e+00 : f32
    %10 = vector.broadcast %cst_6 : f32 to vector<2x32xf32>
    %cst_7 = arith.constant 0.000000e+00 : f32
    %11 = vector.broadcast %cst_7 : f32 to vector<2x32xf32>
    %12 = vector.extract_strided_slice %9 {offsets = [0, 0], sizes = [2, 128], strides = [1, 1]} : vector<16x128xf32> to vector<2x128xf32>
    %cst_8 = arith.constant dense<0.000000e+00> : vector<2x128xf32>
    %13 = tpu.matmul %10, %5, %cst_8 {dimension_numbers = #tpu.dot_dimension_numbers<[1], [0], [0], [1], [0, 0, 1, 1], [], []>} : vector<2x32xf32>, vector<32x128xf32>, vector<2x128xf32> -> vector<2x128xf32>
    %14 = arith.addf %12, %13 : vector<2x128xf32>
    %15 = arith.negf %14 : vector<2x128xf32>
    %16 = math.exp %15 : vector<2x128xf32>
    %cst_9 = arith.constant 1.000000e+00 : f32
    %17 = vector.broadcast %cst_9 : f32 to vector<2x128xf32>
    %18 = arith.addf %17, %16 : vector<2x128xf32>
    %19 = arith.divf %17, %18 : vector<2x128xf32>
    %20 = math.tanh %14 : vector<2x128xf32>
    %21 = vector.extract_strided_slice %19 {offsets = [0, 0], sizes = [2, 32], strides = [1, 1]} : vector<2x128xf32> to vector<2x32xf32>
    %22 = vector.extract_strided_slice %19 {offsets = [0, 32], sizes = [2, 32], strides = [1, 1]} : vector<2x128xf32> to vector<2x32xf32>
    %23 = vector.extract_strided_slice %20 {offsets = [0, 64], sizes = [2, 32], strides = [1, 1]} : vector<2x128xf32> to vector<2x32xf32>
    %24 = vector.extract_strided_slice %19 {offsets = [0, 96], sizes = [2, 32], strides = [1, 1]} : vector<2x128xf32> to vector<2x32xf32>
    %25 = arith.mulf %22, %11 : vector<2x32xf32>
    %26 = arith.mulf %21, %23 : vector<2x32xf32>
    %27 = arith.addf %25, %26 : vector<2x32xf32>
    %28 = math.tanh %27 : vector<2x32xf32>
    %29 = arith.mulf %24, %28 : vector<2x32xf32>
    %30 = vector.extract_strided_slice %9 {offsets = [2, 0], sizes = [2, 128], strides = [1, 1]} : vector<16x128xf32> to vector<2x128xf32>
    %cst_10 = arith.constant dense<0.000000e+00> : vector<2x128xf32>
    %31 = tpu.matmul %29, %5, %cst_10 {dimension_numbers = #tpu.dot_dimension_numbers<[1], [0], [0], [1], [0, 0, 1, 1], [], []>} : vector<2x32xf32>, vector<32x128xf32>, vector<2x128xf32> -> vector<2x128xf32>
    %32 = arith.addf %30, %31 : vector<2x128xf32>
    %33 = arith.negf %32 : vector<2x128xf32>
    %34 = math.exp %33 : vector<2x128xf32>
    %cst_11 = arith.constant 1.000000e+00 : f32
    %35 = vector.broadcast %cst_11 : f32 to vector<2x128xf32>
    %36 = arith.addf %35, %34 : vector<2x128xf32>
    %37 = arith.divf %35, %36 : vector<2x128xf32>
    %38 = math.tanh %32 : vector<2x128xf32>
    %39 = vector.extract_strided_slice %37 {offsets = [0, 0], sizes = [2, 32], strides = [1, 1]} : vector<2x128xf32> to vector<2x32xf32>
    %40 = vector.extract_strided_slice %37 {offsets = [0, 32], sizes = [2, 32], strides = [1, 1]} : vector<2x128xf32> to vector<2x32xf32>
    %41 = vector.extract_strided_slice %38 {offsets = [0, 64], sizes = [2, 32], strides = [1, 1]} : vector<2x128xf32> to vector<2x32xf32>
    %42 = vector.extract_strided_slice %37 {offsets = [0, 96], sizes = [2, 32], strides = [1, 1]} : vector<2x128xf32> to vector<2x32xf32>
    %43 = arith.mulf %40, %27 : vector<2x32xf32>
    %44 = arith.mulf %39, %41 : vector<2x32xf32>
    %45 = arith.addf %43, %44 : vector<2x32xf32>
    %46 = math.tanh %45 : vector<2x32xf32>
    %47 = arith.mulf %42, %46 : vector<2x32xf32>
    %48 = vector.extract_strided_slice %9 {offsets = [4, 0], sizes = [2, 128], strides = [1, 1]} : vector<16x128xf32> to vector<2x128xf32>
    %cst_12 = arith.constant dense<0.000000e+00> : vector<2x128xf32>
    %49 = tpu.matmul %47, %5, %cst_12 {dimension_numbers = #tpu.dot_dimension_numbers<[1], [0], [0], [1], [0, 0, 1, 1], [], []>} : vector<2x32xf32>, vector<32x128xf32>, vector<2x128xf32> -> vector<2x128xf32>
    %50 = arith.addf %48, %49 : vector<2x128xf32>
    %51 = arith.negf %50 : vector<2x128xf32>
    %52 = math.exp %51 : vector<2x128xf32>
    %cst_13 = arith.constant 1.000000e+00 : f32
    %53 = vector.broadcast %cst_13 : f32 to vector<2x128xf32>
    %54 = arith.addf %53, %52 : vector<2x128xf32>
    %55 = arith.divf %53, %54 : vector<2x128xf32>
    %56 = math.tanh %50 : vector<2x128xf32>
    %57 = vector.extract_strided_slice %55 {offsets = [0, 0], sizes = [2, 32], strides = [1, 1]} : vector<2x128xf32> to vector<2x32xf32>
    %58 = vector.extract_strided_slice %55 {offsets = [0, 32], sizes = [2, 32], strides = [1, 1]} : vector<2x128xf32> to vector<2x32xf32>
    %59 = vector.extract_strided_slice %56 {offsets = [0, 64], sizes = [2, 32], strides = [1, 1]} : vector<2x128xf32> to vector<2x32xf32>
    %60 = vector.extract_strided_slice %55 {offsets = [0, 96], sizes = [2, 32], strides = [1, 1]} : vector<2x128xf32> to vector<2x32xf32>
    %61 = arith.mulf %58, %45 : vector<2x32xf32>
    %62 = arith.mulf %57, %59 : vector<2x32xf32>
    %63 = arith.addf %61, %62 : vector<2x32xf32>
    %64 = math.tanh %63 : vector<2x32xf32>
    %65 = arith.mulf %60, %64 : vector<2x32xf32>
    %66 = vector.extract_strided_slice %9 {offsets = [6, 0], sizes = [2, 128], strides = [1, 1]} : vector<16x128xf32> to vector<2x128xf32>
    %cst_14 = arith.constant dense<0.000000e+00> : vector<2x128xf32>
    %67 = tpu.matmul %65, %5, %cst_14 {dimension_numbers = #tpu.dot_dimension_numbers<[1], [0], [0], [1], [0, 0, 1, 1], [], []>} : vector<2x32xf32>, vector<32x128xf32>, vector<2x128xf32> -> vector<2x128xf32>
    %68 = arith.addf %66, %67 : vector<2x128xf32>
    %69 = arith.negf %68 : vector<2x128xf32>
    %70 = math.exp %69 : vector<2x128xf32>
    %cst_15 = arith.constant 1.000000e+00 : f32
    %71 = vector.broadcast %cst_15 : f32 to vector<2x128xf32>
    %72 = arith.addf %71, %70 : vector<2x128xf32>
    %73 = arith.divf %71, %72 : vector<2x128xf32>
    %74 = math.tanh %68 : vector<2x128xf32>
    %75 = vector.extract_strided_slice %73 {offsets = [0, 0], sizes = [2, 32], strides = [1, 1]} : vector<2x128xf32> to vector<2x32xf32>
    %76 = vector.extract_strided_slice %73 {offsets = [0, 32], sizes = [2, 32], strides = [1, 1]} : vector<2x128xf32> to vector<2x32xf32>
    %77 = vector.extract_strided_slice %74 {offsets = [0, 64], sizes = [2, 32], strides = [1, 1]} : vector<2x128xf32> to vector<2x32xf32>
    %78 = vector.extract_strided_slice %73 {offsets = [0, 96], sizes = [2, 32], strides = [1, 1]} : vector<2x128xf32> to vector<2x32xf32>
    %79 = arith.mulf %76, %63 : vector<2x32xf32>
    %80 = arith.mulf %75, %77 : vector<2x32xf32>
    %81 = arith.addf %79, %80 : vector<2x32xf32>
    %82 = math.tanh %81 : vector<2x32xf32>
    %83 = arith.mulf %78, %82 : vector<2x32xf32>
    %84 = vector.extract_strided_slice %9 {offsets = [8, 0], sizes = [2, 128], strides = [1, 1]} : vector<16x128xf32> to vector<2x128xf32>
    %cst_16 = arith.constant dense<0.000000e+00> : vector<2x128xf32>
    %85 = tpu.matmul %83, %5, %cst_16 {dimension_numbers = #tpu.dot_dimension_numbers<[1], [0], [0], [1], [0, 0, 1, 1], [], []>} : vector<2x32xf32>, vector<32x128xf32>, vector<2x128xf32> -> vector<2x128xf32>
    %86 = arith.addf %84, %85 : vector<2x128xf32>
    %87 = arith.negf %86 : vector<2x128xf32>
    %88 = math.exp %87 : vector<2x128xf32>
    %cst_17 = arith.constant 1.000000e+00 : f32
    %89 = vector.broadcast %cst_17 : f32 to vector<2x128xf32>
    %90 = arith.addf %89, %88 : vector<2x128xf32>
    %91 = arith.divf %89, %90 : vector<2x128xf32>
    %92 = math.tanh %86 : vector<2x128xf32>
    %93 = vector.extract_strided_slice %91 {offsets = [0, 0], sizes = [2, 32], strides = [1, 1]} : vector<2x128xf32> to vector<2x32xf32>
    %94 = vector.extract_strided_slice %91 {offsets = [0, 32], sizes = [2, 32], strides = [1, 1]} : vector<2x128xf32> to vector<2x32xf32>
    %95 = vector.extract_strided_slice %92 {offsets = [0, 64], sizes = [2, 32], strides = [1, 1]} : vector<2x128xf32> to vector<2x32xf32>
    %96 = vector.extract_strided_slice %91 {offsets = [0, 96], sizes = [2, 32], strides = [1, 1]} : vector<2x128xf32> to vector<2x32xf32>
    %97 = arith.mulf %94, %81 : vector<2x32xf32>
    %98 = arith.mulf %93, %95 : vector<2x32xf32>
    %99 = arith.addf %97, %98 : vector<2x32xf32>
    %100 = math.tanh %99 : vector<2x32xf32>
    %101 = arith.mulf %96, %100 : vector<2x32xf32>
    %102 = vector.extract_strided_slice %9 {offsets = [10, 0], sizes = [2, 128], strides = [1, 1]} : vector<16x128xf32> to vector<2x128xf32>
    %cst_18 = arith.constant dense<0.000000e+00> : vector<2x128xf32>
    %103 = tpu.matmul %101, %5, %cst_18 {dimension_numbers = #tpu.dot_dimension_numbers<[1], [0], [0], [1], [0, 0, 1, 1], [], []>} : vector<2x32xf32>, vector<32x128xf32>, vector<2x128xf32> -> vector<2x128xf32>
    %104 = arith.addf %102, %103 : vector<2x128xf32>
    %105 = arith.negf %104 : vector<2x128xf32>
    %106 = math.exp %105 : vector<2x128xf32>
    %cst_19 = arith.constant 1.000000e+00 : f32
    %107 = vector.broadcast %cst_19 : f32 to vector<2x128xf32>
    %108 = arith.addf %107, %106 : vector<2x128xf32>
    %109 = arith.divf %107, %108 : vector<2x128xf32>
    %110 = math.tanh %104 : vector<2x128xf32>
    %111 = vector.extract_strided_slice %109 {offsets = [0, 0], sizes = [2, 32], strides = [1, 1]} : vector<2x128xf32> to vector<2x32xf32>
    %112 = vector.extract_strided_slice %109 {offsets = [0, 32], sizes = [2, 32], strides = [1, 1]} : vector<2x128xf32> to vector<2x32xf32>
    %113 = vector.extract_strided_slice %110 {offsets = [0, 64], sizes = [2, 32], strides = [1, 1]} : vector<2x128xf32> to vector<2x32xf32>
    %114 = vector.extract_strided_slice %109 {offsets = [0, 96], sizes = [2, 32], strides = [1, 1]} : vector<2x128xf32> to vector<2x32xf32>
    %115 = arith.mulf %112, %99 : vector<2x32xf32>
    %116 = arith.mulf %111, %113 : vector<2x32xf32>
    %117 = arith.addf %115, %116 : vector<2x32xf32>
    %118 = math.tanh %117 : vector<2x32xf32>
    %119 = arith.mulf %114, %118 : vector<2x32xf32>
    %120 = vector.extract_strided_slice %9 {offsets = [12, 0], sizes = [2, 128], strides = [1, 1]} : vector<16x128xf32> to vector<2x128xf32>
    %cst_20 = arith.constant dense<0.000000e+00> : vector<2x128xf32>
    %121 = tpu.matmul %119, %5, %cst_20 {dimension_numbers = #tpu.dot_dimension_numbers<[1], [0], [0], [1], [0, 0, 1, 1], [], []>} : vector<2x32xf32>, vector<32x128xf32>, vector<2x128xf32> -> vector<2x128xf32>
    %122 = arith.addf %120, %121 : vector<2x128xf32>
    %123 = arith.negf %122 : vector<2x128xf32>
    %124 = math.exp %123 : vector<2x128xf32>
    %cst_21 = arith.constant 1.000000e+00 : f32
    %125 = vector.broadcast %cst_21 : f32 to vector<2x128xf32>
    %126 = arith.addf %125, %124 : vector<2x128xf32>
    %127 = arith.divf %125, %126 : vector<2x128xf32>
    %128 = math.tanh %122 : vector<2x128xf32>
    %129 = vector.extract_strided_slice %127 {offsets = [0, 0], sizes = [2, 32], strides = [1, 1]} : vector<2x128xf32> to vector<2x32xf32>
    %130 = vector.extract_strided_slice %127 {offsets = [0, 32], sizes = [2, 32], strides = [1, 1]} : vector<2x128xf32> to vector<2x32xf32>
    %131 = vector.extract_strided_slice %128 {offsets = [0, 64], sizes = [2, 32], strides = [1, 1]} : vector<2x128xf32> to vector<2x32xf32>
    %132 = vector.extract_strided_slice %127 {offsets = [0, 96], sizes = [2, 32], strides = [1, 1]} : vector<2x128xf32> to vector<2x32xf32>
    %133 = arith.mulf %130, %117 : vector<2x32xf32>
    %134 = arith.mulf %129, %131 : vector<2x32xf32>
    %135 = arith.addf %133, %134 : vector<2x32xf32>
    %136 = math.tanh %135 : vector<2x32xf32>
    %137 = arith.mulf %132, %136 : vector<2x32xf32>
    %138 = vector.extract_strided_slice %9 {offsets = [14, 0], sizes = [2, 128], strides = [1, 1]} : vector<16x128xf32> to vector<2x128xf32>
    %cst_22 = arith.constant dense<0.000000e+00> : vector<2x128xf32>
    %139 = tpu.matmul %137, %5, %cst_22 {dimension_numbers = #tpu.dot_dimension_numbers<[1], [0], [0], [1], [0, 0, 1, 1], [], []>} : vector<2x32xf32>, vector<32x128xf32>, vector<2x128xf32> -> vector<2x128xf32>
    %140 = arith.addf %138, %139 : vector<2x128xf32>
    %141 = arith.negf %140 : vector<2x128xf32>
    %142 = math.exp %141 : vector<2x128xf32>
    %cst_23 = arith.constant 1.000000e+00 : f32
    %143 = vector.broadcast %cst_23 : f32 to vector<2x128xf32>
    %144 = arith.addf %143, %142 : vector<2x128xf32>
    %145 = arith.divf %143, %144 : vector<2x128xf32>
    %146 = math.tanh %140 : vector<2x128xf32>
    %147 = vector.extract_strided_slice %145 {offsets = [0, 0], sizes = [2, 32], strides = [1, 1]} : vector<2x128xf32> to vector<2x32xf32>
    %148 = vector.extract_strided_slice %145 {offsets = [0, 32], sizes = [2, 32], strides = [1, 1]} : vector<2x128xf32> to vector<2x32xf32>
    %149 = vector.extract_strided_slice %146 {offsets = [0, 64], sizes = [2, 32], strides = [1, 1]} : vector<2x128xf32> to vector<2x32xf32>
    %150 = vector.extract_strided_slice %145 {offsets = [0, 96], sizes = [2, 32], strides = [1, 1]} : vector<2x128xf32> to vector<2x32xf32>
    %151 = arith.mulf %148, %135 : vector<2x32xf32>
    %152 = arith.mulf %147, %149 : vector<2x32xf32>
    %153 = arith.addf %151, %152 : vector<2x32xf32>
    %154 = math.tanh %153 : vector<2x32xf32>
    %155 = arith.mulf %150, %154 : vector<2x32xf32>
    %156 = tpu.concatenate %29, %47, %65, %83, %101, %119, %137, %155 in 0 : vector<2x32xf32>, vector<2x32xf32>, vector<2x32xf32>, vector<2x32xf32>, vector<2x32xf32>, vector<2x32xf32>, vector<2x32xf32>, vector<2x32xf32> -> vector<16x32xf32>
    %c1 = arith.constant 1 : index
    %c0_24 = arith.constant 0 : index
    %c0_25 = arith.constant 0 : index
    %157 = vector.load %arg1[%c1, %c0_24, %c0_25] : memref<2x64x128xf32, #tpu.memory_space<vmem>>, vector<1x64x128xf32>
    %158 = vector.shape_cast %157 : vector<1x64x128xf32> to vector<64x128xf32>
    %159 = vector.extract_strided_slice %158 {offsets = [0, 0], sizes = [32, 128], strides = [1, 1]} : vector<64x128xf32> to vector<32x128xf32>
    %160 = vector.extract_strided_slice %158 {offsets = [32, 0], sizes = [32, 128], strides = [1, 1]} : vector<64x128xf32> to vector<32x128xf32>
    %161 = vector.extract_strided_slice %0 {offsets = [6, 0], sizes = [1, 128], strides = [1, 1]} : vector<7x128xf32> to vector<1x128xf32>
    %cst_26 = arith.constant dense<0.000000e+00> : vector<16x128xf32>
    %162 = tpu.matmul %156, %159, %cst_26 {dimension_numbers = #tpu.dot_dimension_numbers<[1], [0], [0], [1], [0, 0, 1, 1], [], []>} : vector<16x32xf32>, vector<32x128xf32>, vector<16x128xf32> -> vector<16x128xf32>
    %163 = vector.broadcast %161 : vector<1x128xf32> to vector<16x128xf32>
    %164 = arith.addf %162, %163 : vector<16x128xf32>
    %cst_27 = arith.constant 0.000000e+00 : f32
    %165 = vector.broadcast %cst_27 : f32 to vector<2x32xf32>
    %cst_28 = arith.constant 0.000000e+00 : f32
    %166 = vector.broadcast %cst_28 : f32 to vector<2x32xf32>
    %167 = vector.extract_strided_slice %164 {offsets = [0, 0], sizes = [2, 128], strides = [1, 1]} : vector<16x128xf32> to vector<2x128xf32>
    %cst_29 = arith.constant dense<0.000000e+00> : vector<2x128xf32>
    %168 = tpu.matmul %165, %160, %cst_29 {dimension_numbers = #tpu.dot_dimension_numbers<[1], [0], [0], [1], [0, 0, 1, 1], [], []>} : vector<2x32xf32>, vector<32x128xf32>, vector<2x128xf32> -> vector<2x128xf32>
    %169 = arith.addf %167, %168 : vector<2x128xf32>
    %170 = arith.negf %169 : vector<2x128xf32>
    %171 = math.exp %170 : vector<2x128xf32>
    %cst_30 = arith.constant 1.000000e+00 : f32
    %172 = vector.broadcast %cst_30 : f32 to vector<2x128xf32>
    %173 = arith.addf %172, %171 : vector<2x128xf32>
    %174 = arith.divf %172, %173 : vector<2x128xf32>
    %175 = math.tanh %169 : vector<2x128xf32>
    %176 = vector.extract_strided_slice %174 {offsets = [0, 0], sizes = [2, 32], strides = [1, 1]} : vector<2x128xf32> to vector<2x32xf32>
    %177 = vector.extract_strided_slice %174 {offsets = [0, 32], sizes = [2, 32], strides = [1, 1]} : vector<2x128xf32> to vector<2x32xf32>
    %178 = vector.extract_strided_slice %175 {offsets = [0, 64], sizes = [2, 32], strides = [1, 1]} : vector<2x128xf32> to vector<2x32xf32>
    %179 = vector.extract_strided_slice %174 {offsets = [0, 96], sizes = [2, 32], strides = [1, 1]} : vector<2x128xf32> to vector<2x32xf32>
    %180 = arith.mulf %177, %166 : vector<2x32xf32>
    %181 = arith.mulf %176, %178 : vector<2x32xf32>
    %182 = arith.addf %180, %181 : vector<2x32xf32>
    %183 = math.tanh %182 : vector<2x32xf32>
    %184 = arith.mulf %179, %183 : vector<2x32xf32>
    %185 = vector.extract_strided_slice %164 {offsets = [2, 0], sizes = [2, 128], strides = [1, 1]} : vector<16x128xf32> to vector<2x128xf32>
    %cst_31 = arith.constant dense<0.000000e+00> : vector<2x128xf32>
    %186 = tpu.matmul %184, %160, %cst_31 {dimension_numbers = #tpu.dot_dimension_numbers<[1], [0], [0], [1], [0, 0, 1, 1], [], []>} : vector<2x32xf32>, vector<32x128xf32>, vector<2x128xf32> -> vector<2x128xf32>
    %187 = arith.addf %185, %186 : vector<2x128xf32>
    %188 = arith.negf %187 : vector<2x128xf32>
    %189 = math.exp %188 : vector<2x128xf32>
    %cst_32 = arith.constant 1.000000e+00 : f32
    %190 = vector.broadcast %cst_32 : f32 to vector<2x128xf32>
    %191 = arith.addf %190, %189 : vector<2x128xf32>
    %192 = arith.divf %190, %191 : vector<2x128xf32>
    %193 = math.tanh %187 : vector<2x128xf32>
    %194 = vector.extract_strided_slice %192 {offsets = [0, 0], sizes = [2, 32], strides = [1, 1]} : vector<2x128xf32> to vector<2x32xf32>
    %195 = vector.extract_strided_slice %192 {offsets = [0, 32], sizes = [2, 32], strides = [1, 1]} : vector<2x128xf32> to vector<2x32xf32>
    %196 = vector.extract_strided_slice %193 {offsets = [0, 64], sizes = [2, 32], strides = [1, 1]} : vector<2x128xf32> to vector<2x32xf32>
    %197 = vector.extract_strided_slice %192 {offsets = [0, 96], sizes = [2, 32], strides = [1, 1]} : vector<2x128xf32> to vector<2x32xf32>
    %198 = arith.mulf %195, %182 : vector<2x32xf32>
    %199 = arith.mulf %194, %196 : vector<2x32xf32>
    %200 = arith.addf %198, %199 : vector<2x32xf32>
    %201 = math.tanh %200 : vector<2x32xf32>
    %202 = arith.mulf %197, %201 : vector<2x32xf32>
    %203 = vector.extract_strided_slice %164 {offsets = [4, 0], sizes = [2, 128], strides = [1, 1]} : vector<16x128xf32> to vector<2x128xf32>
    %cst_33 = arith.constant dense<0.000000e+00> : vector<2x128xf32>
    %204 = tpu.matmul %202, %160, %cst_33 {dimension_numbers = #tpu.dot_dimension_numbers<[1], [0], [0], [1], [0, 0, 1, 1], [], []>} : vector<2x32xf32>, vector<32x128xf32>, vector<2x128xf32> -> vector<2x128xf32>
    %205 = arith.addf %203, %204 : vector<2x128xf32>
    %206 = arith.negf %205 : vector<2x128xf32>
    %207 = math.exp %206 : vector<2x128xf32>
    %cst_34 = arith.constant 1.000000e+00 : f32
    %208 = vector.broadcast %cst_34 : f32 to vector<2x128xf32>
    %209 = arith.addf %208, %207 : vector<2x128xf32>
    %210 = arith.divf %208, %209 : vector<2x128xf32>
    %211 = math.tanh %205 : vector<2x128xf32>
    %212 = vector.extract_strided_slice %210 {offsets = [0, 0], sizes = [2, 32], strides = [1, 1]} : vector<2x128xf32> to vector<2x32xf32>
    %213 = vector.extract_strided_slice %210 {offsets = [0, 32], sizes = [2, 32], strides = [1, 1]} : vector<2x128xf32> to vector<2x32xf32>
    %214 = vector.extract_strided_slice %211 {offsets = [0, 64], sizes = [2, 32], strides = [1, 1]} : vector<2x128xf32> to vector<2x32xf32>
    %215 = vector.extract_strided_slice %210 {offsets = [0, 96], sizes = [2, 32], strides = [1, 1]} : vector<2x128xf32> to vector<2x32xf32>
    %216 = arith.mulf %213, %200 : vector<2x32xf32>
    %217 = arith.mulf %212, %214 : vector<2x32xf32>
    %218 = arith.addf %216, %217 : vector<2x32xf32>
    %219 = math.tanh %218 : vector<2x32xf32>
    %220 = arith.mulf %215, %219 : vector<2x32xf32>
    %221 = vector.extract_strided_slice %164 {offsets = [6, 0], sizes = [2, 128], strides = [1, 1]} : vector<16x128xf32> to vector<2x128xf32>
    %cst_35 = arith.constant dense<0.000000e+00> : vector<2x128xf32>
    %222 = tpu.matmul %220, %160, %cst_35 {dimension_numbers = #tpu.dot_dimension_numbers<[1], [0], [0], [1], [0, 0, 1, 1], [], []>} : vector<2x32xf32>, vector<32x128xf32>, vector<2x128xf32> -> vector<2x128xf32>
    %223 = arith.addf %221, %222 : vector<2x128xf32>
    %224 = arith.negf %223 : vector<2x128xf32>
    %225 = math.exp %224 : vector<2x128xf32>
    %cst_36 = arith.constant 1.000000e+00 : f32
    %226 = vector.broadcast %cst_36 : f32 to vector<2x128xf32>
    %227 = arith.addf %226, %225 : vector<2x128xf32>
    %228 = arith.divf %226, %227 : vector<2x128xf32>
    %229 = math.tanh %223 : vector<2x128xf32>
    %230 = vector.extract_strided_slice %228 {offsets = [0, 0], sizes = [2, 32], strides = [1, 1]} : vector<2x128xf32> to vector<2x32xf32>
    %231 = vector.extract_strided_slice %228 {offsets = [0, 32], sizes = [2, 32], strides = [1, 1]} : vector<2x128xf32> to vector<2x32xf32>
    %232 = vector.extract_strided_slice %229 {offsets = [0, 64], sizes = [2, 32], strides = [1, 1]} : vector<2x128xf32> to vector<2x32xf32>
    %233 = vector.extract_strided_slice %228 {offsets = [0, 96], sizes = [2, 32], strides = [1, 1]} : vector<2x128xf32> to vector<2x32xf32>
    %234 = arith.mulf %231, %218 : vector<2x32xf32>
    %235 = arith.mulf %230, %232 : vector<2x32xf32>
    %236 = arith.addf %234, %235 : vector<2x32xf32>
    %237 = math.tanh %236 : vector<2x32xf32>
    %238 = arith.mulf %233, %237 : vector<2x32xf32>
    %239 = vector.extract_strided_slice %164 {offsets = [8, 0], sizes = [2, 128], strides = [1, 1]} : vector<16x128xf32> to vector<2x128xf32>
    %cst_37 = arith.constant dense<0.000000e+00> : vector<2x128xf32>
    %240 = tpu.matmul %238, %160, %cst_37 {dimension_numbers = #tpu.dot_dimension_numbers<[1], [0], [0], [1], [0, 0, 1, 1], [], []>} : vector<2x32xf32>, vector<32x128xf32>, vector<2x128xf32> -> vector<2x128xf32>
    %241 = arith.addf %239, %240 : vector<2x128xf32>
    %242 = arith.negf %241 : vector<2x128xf32>
    %243 = math.exp %242 : vector<2x128xf32>
    %cst_38 = arith.constant 1.000000e+00 : f32
    %244 = vector.broadcast %cst_38 : f32 to vector<2x128xf32>
    %245 = arith.addf %244, %243 : vector<2x128xf32>
    %246 = arith.divf %244, %245 : vector<2x128xf32>
    %247 = math.tanh %241 : vector<2x128xf32>
    %248 = vector.extract_strided_slice %246 {offsets = [0, 0], sizes = [2, 32], strides = [1, 1]} : vector<2x128xf32> to vector<2x32xf32>
    %249 = vector.extract_strided_slice %246 {offsets = [0, 32], sizes = [2, 32], strides = [1, 1]} : vector<2x128xf32> to vector<2x32xf32>
    %250 = vector.extract_strided_slice %247 {offsets = [0, 64], sizes = [2, 32], strides = [1, 1]} : vector<2x128xf32> to vector<2x32xf32>
    %251 = vector.extract_strided_slice %246 {offsets = [0, 96], sizes = [2, 32], strides = [1, 1]} : vector<2x128xf32> to vector<2x32xf32>
    %252 = arith.mulf %249, %236 : vector<2x32xf32>
    %253 = arith.mulf %248, %250 : vector<2x32xf32>
    %254 = arith.addf %252, %253 : vector<2x32xf32>
    %255 = math.tanh %254 : vector<2x32xf32>
    %256 = arith.mulf %251, %255 : vector<2x32xf32>
    %257 = vector.extract_strided_slice %164 {offsets = [10, 0], sizes = [2, 128], strides = [1, 1]} : vector<16x128xf32> to vector<2x128xf32>
    %cst_39 = arith.constant dense<0.000000e+00> : vector<2x128xf32>
    %258 = tpu.matmul %256, %160, %cst_39 {dimension_numbers = #tpu.dot_dimension_numbers<[1], [0], [0], [1], [0, 0, 1, 1], [], []>} : vector<2x32xf32>, vector<32x128xf32>, vector<2x128xf32> -> vector<2x128xf32>
    %259 = arith.addf %257, %258 : vector<2x128xf32>
    %260 = arith.negf %259 : vector<2x128xf32>
    %261 = math.exp %260 : vector<2x128xf32>
    %cst_40 = arith.constant 1.000000e+00 : f32
    %262 = vector.broadcast %cst_40 : f32 to vector<2x128xf32>
    %263 = arith.addf %262, %261 : vector<2x128xf32>
    %264 = arith.divf %262, %263 : vector<2x128xf32>
    %265 = math.tanh %259 : vector<2x128xf32>
    %266 = vector.extract_strided_slice %264 {offsets = [0, 0], sizes = [2, 32], strides = [1, 1]} : vector<2x128xf32> to vector<2x32xf32>
    %267 = vector.extract_strided_slice %264 {offsets = [0, 32], sizes = [2, 32], strides = [1, 1]} : vector<2x128xf32> to vector<2x32xf32>
    %268 = vector.extract_strided_slice %265 {offsets = [0, 64], sizes = [2, 32], strides = [1, 1]} : vector<2x128xf32> to vector<2x32xf32>
    %269 = vector.extract_strided_slice %264 {offsets = [0, 96], sizes = [2, 32], strides = [1, 1]} : vector<2x128xf32> to vector<2x32xf32>
    %270 = arith.mulf %267, %254 : vector<2x32xf32>
    %271 = arith.mulf %266, %268 : vector<2x32xf32>
    %272 = arith.addf %270, %271 : vector<2x32xf32>
    %273 = math.tanh %272 : vector<2x32xf32>
    %274 = arith.mulf %269, %273 : vector<2x32xf32>
    %275 = vector.extract_strided_slice %164 {offsets = [12, 0], sizes = [2, 128], strides = [1, 1]} : vector<16x128xf32> to vector<2x128xf32>
    %cst_41 = arith.constant dense<0.000000e+00> : vector<2x128xf32>
    %276 = tpu.matmul %274, %160, %cst_41 {dimension_numbers = #tpu.dot_dimension_numbers<[1], [0], [0], [1], [0, 0, 1, 1], [], []>} : vector<2x32xf32>, vector<32x128xf32>, vector<2x128xf32> -> vector<2x128xf32>
    %277 = arith.addf %275, %276 : vector<2x128xf32>
    %278 = arith.negf %277 : vector<2x128xf32>
    %279 = math.exp %278 : vector<2x128xf32>
    %cst_42 = arith.constant 1.000000e+00 : f32
    %280 = vector.broadcast %cst_42 : f32 to vector<2x128xf32>
    %281 = arith.addf %280, %279 : vector<2x128xf32>
    %282 = arith.divf %280, %281 : vector<2x128xf32>
    %283 = math.tanh %277 : vector<2x128xf32>
    %284 = vector.extract_strided_slice %282 {offsets = [0, 0], sizes = [2, 32], strides = [1, 1]} : vector<2x128xf32> to vector<2x32xf32>
    %285 = vector.extract_strided_slice %282 {offsets = [0, 32], sizes = [2, 32], strides = [1, 1]} : vector<2x128xf32> to vector<2x32xf32>
    %286 = vector.extract_strided_slice %283 {offsets = [0, 64], sizes = [2, 32], strides = [1, 1]} : vector<2x128xf32> to vector<2x32xf32>
    %287 = vector.extract_strided_slice %282 {offsets = [0, 96], sizes = [2, 32], strides = [1, 1]} : vector<2x128xf32> to vector<2x32xf32>
    %288 = arith.mulf %285, %272 : vector<2x32xf32>
    %289 = arith.mulf %284, %286 : vector<2x32xf32>
    %290 = arith.addf %288, %289 : vector<2x32xf32>
    %291 = math.tanh %290 : vector<2x32xf32>
    %292 = arith.mulf %287, %291 : vector<2x32xf32>
    %293 = vector.extract_strided_slice %164 {offsets = [14, 0], sizes = [2, 128], strides = [1, 1]} : vector<16x128xf32> to vector<2x128xf32>
    %cst_43 = arith.constant dense<0.000000e+00> : vector<2x128xf32>
    %294 = tpu.matmul %292, %160, %cst_43 {dimension_numbers = #tpu.dot_dimension_numbers<[1], [0], [0], [1], [0, 0, 1, 1], [], []>} : vector<2x32xf32>, vector<32x128xf32>, vector<2x128xf32> -> vector<2x128xf32>
    %295 = arith.addf %293, %294 : vector<2x128xf32>
    %296 = arith.negf %295 : vector<2x128xf32>
    %297 = math.exp %296 : vector<2x128xf32>
    %cst_44 = arith.constant 1.000000e+00 : f32
    %298 = vector.broadcast %cst_44 : f32 to vector<2x128xf32>
    %299 = arith.addf %298, %297 : vector<2x128xf32>
    %300 = arith.divf %298, %299 : vector<2x128xf32>
    %301 = math.tanh %295 : vector<2x128xf32>
    %302 = vector.extract_strided_slice %300 {offsets = [0, 0], sizes = [2, 32], strides = [1, 1]} : vector<2x128xf32> to vector<2x32xf32>
    %303 = vector.extract_strided_slice %300 {offsets = [0, 32], sizes = [2, 32], strides = [1, 1]} : vector<2x128xf32> to vector<2x32xf32>
    %304 = vector.extract_strided_slice %301 {offsets = [0, 64], sizes = [2, 32], strides = [1, 1]} : vector<2x128xf32> to vector<2x32xf32>
    %305 = vector.extract_strided_slice %300 {offsets = [0, 96], sizes = [2, 32], strides = [1, 1]} : vector<2x128xf32> to vector<2x32xf32>
    %306 = arith.mulf %303, %290 : vector<2x32xf32>
    %307 = arith.mulf %302, %304 : vector<2x32xf32>
    %308 = arith.addf %306, %307 : vector<2x32xf32>
    %309 = math.tanh %308 : vector<2x32xf32>
    %310 = arith.mulf %305, %309 : vector<2x32xf32>
    %311 = vector.extract_strided_slice %0 {offsets = [0, 0], sizes = [1, 32], strides = [1, 1]} : vector<7x128xf32> to vector<1x32xf32>
    %312 = vector.extract_strided_slice %0 {offsets = [1, 0], sizes = [1, 128], strides = [1, 1]} : vector<7x128xf32> to vector<1x128xf32>
    %313 = vector.extract_strided_slice %0 {offsets = [2, 0], sizes = [1, 128], strides = [1, 1]} : vector<7x128xf32> to vector<1x128xf32>
    %314 = vector.extract_strided_slice %0 {offsets = [3, 0], sizes = [2, 1], strides = [1, 1]} : vector<7x128xf32> to vector<2x1xf32>
    %c0_45 = arith.constant 0 : index
    %315 = memref.load %arg3[%c0_45] : memref<4xf32, #tpu.memory_space<smem>>
    %c1_46 = arith.constant 1 : index
    %316 = memref.load %arg3[%c1_46] : memref<4xf32, #tpu.memory_space<smem>>
    %c2 = arith.constant 2 : index
    %317 = memref.load %arg3[%c2] : memref<4xf32, #tpu.memory_space<smem>>
    %c3 = arith.constant 3 : index
    %318 = memref.load %arg3[%c3] : memref<4xf32, #tpu.memory_space<smem>>
    %319 = vector.broadcast %311 : vector<1x32xf32> to vector<2x32xf32>
    %320 = arith.mulf %310, %319 : vector<2x32xf32>
    %cst_47 = arith.constant dense<0.000000e+00> : vector<2xf32>
    %321 = vector.multi_reduction <add>, %320, %cst_47 [1] : vector<2x32xf32> to vector<2xf32>
    %322 = vector.shape_cast %321 : vector<2xf32> to vector<2x1xf32>
    %323 = vector.broadcast %315 : f32 to vector<2x1xf32>
    %324 = arith.addf %322, %323 : vector<2x1xf32>
    %325 = vector.broadcast %316 : f32 to vector<2x1xf32>
    %326 = arith.mulf %325, %324 : vector<2x1xf32>
    %327 = vector.broadcast %317 : f32 to vector<2x1xf32>
    %328 = arith.addf %326, %327 : vector<2x1xf32>
    %cst_48 = arith.constant 0.000000e+00 : f32
    %329 = vector.broadcast %cst_48 : f32 to vector<2x1xf32>
    %330 = arith.maximumf %328, %329 : vector<2x1xf32>
    %cst_49 = arith.constant 0.000000e+00 : f32
    %331 = vector.broadcast %cst_49 : f32 to vector<1x128xf32>
    %332 = arith.maximumf %313, %331 : vector<1x128xf32>
    %333 = arith.mulf %330, %314 : vector<2x1xf32>
    %cst_50 = arith.constant dense<0.000000e+00> : vector<1xf32>
    %334 = vector.multi_reduction <add>, %333, %cst_50 [0] : vector<2x1xf32> to vector<1xf32>
    %335 = vector.shape_cast %334 : vector<1xf32> to vector<1x1xf32>
    %336 = arith.mulf %332, %312 : vector<1x128xf32>
    %cst_51 = arith.constant dense<0.000000e+00> : vector<1xf32>
    %337 = vector.multi_reduction <add>, %336, %cst_51 [1] : vector<1x128xf32> to vector<1xf32>
    %338 = vector.shape_cast %337 : vector<1xf32> to vector<1x1xf32>
    %339 = arith.addf %335, %338 : vector<1x1xf32>
    %340 = vector.broadcast %318 : f32 to vector<1x1xf32>
    %341 = arith.addf %339, %340 : vector<1x1xf32>
    %c0_52 = arith.constant 0 : index
    %c0_53 = arith.constant 0 : index
    %342 = vector.load %arg4[%c0_52, %c0_53] : memref<1x1xf32, #tpu.memory_space<vmem>>, vector<1x1xf32>
    tpu.vector_store %arg4[%c0_52, %c0_53], %341 {strides = array<i32>} : memref<1x1xf32, #tpu.memory_space<vmem>>, vector<1x1xf32>,
    return
  }
}

</mosaic_0001>

<llo_original>
// kernel: tpu_custom_call.1
$region0: #{tpu_custom_call.1}
  #allocation0 [shape = 'u32[]', space=smem, size = 0x4, offset = 0x4, fixed_abs, tag = 'smem constant byte address 0x4 - core index']
  #allocation1 [shape = 'u32[144,128]{1,0:T(1,128)}', space=vmem, size = 0x12000, scoped, tag = 'internal scratch']
  %s0 = inlined_call_operand.hbm [shape: f32[16,32], index: 0, kind: input, shape index: {}]
  %s1 = inlined_call_operand.hbm [shape: f32[2,64,128], index: 1, kind: input, shape index: {}]
  %s2 = inlined_call_operand.hbm [shape: f32[7,128], index: 2, kind: input, shape index: {}]
  %s3 = inlined_call_operand.vmem [shape: f32[4], index: 3, kind: input, shape index: {}]
  %s4 = inlined_call_operand.hbm [shape: f32[1,1], index: 4, kind: output, shape index: {}]
  %s5 = sld [smem:[#allocation0]]
  $region42: #{tpu_custom_call.1} parent=0
    _
  %s7 = ssub.s32 1, %s5
  %s8 = scalar_select 0, %s7, %s5
  $region1: #{tpu_custom_call.1} parent=0
    #allocation2 [shape = 'u8[8192]{0}', space=vmem, size = 0x2000, scoped, tag = 'input window, operand 0, single buffered']
    #allocation3 [shape = 's32[1]{0}', space=sflag, size = 0x4, scoped, tag = 'scoped memory for tpu_custom_call.1']
    #allocation4 [shape = 's32[1]{0}', space=sflag, size = 0x4, scoped, tag = 'scoped memory for tpu_custom_call.1']
    #allocation5 [shape = 's32[1]{0}', space=sflag, size = 0x4, scoped, tag = 'scoped memory for tpu_custom_call.1']
    #allocation6 [shape = 'u8[65536]{0}', space=vmem, size = 0x10000, scoped, tag = 'input window, operand 1, single buffered']
    #allocation7 [shape = 's32[1]{0}', space=sflag, size = 0x4, scoped, tag = 'scoped memory for tpu_custom_call.1']
    #allocation8 [shape = 'u8[4096]{0}', space=vmem, size = 0x1000, scoped, tag = 'input window, operand 2, single buffered']
    #allocation9 [shape = 'u8[512]{0}', space=smem, size = 0x200, scoped, tag = 'input window, operand 3, single buffered']
    #allocation10 [shape = 'u8[512]{0}', space=vmem, size = 0x400, scoped, tag = 'output window, operand 0, single buffered']
    %9 = vsyncpa [#allocation3], 0
    %10 = vsyncpa [#allocation7], 0
    %11 = vsyncpa [#allocation5], 0
    %12 = vsyncpa [#allocation4], 0
    // Predicated region
    $region2: #{tpu_custom_call.1} parent=1 // pred_check
      _
    $region3: #{tpu_custom_call.1} parent=1 // pred_check_branch
      %14 = sbr.rel (0) target = $region5
    $region4: #{tpu_custom_call.1} parent=1 // pred_region
      %s16 = ssub.s32 256, 256
      %17 = vsyncadd [#allocation3], %s16
      %s18 = sshll.u32 [#allocation2], 4
      %s19 = int_to_ptr.vmem [resolvable:$true] %s18
      %24 = dma.hbm_to_vmem [thread:$0]  %s0, 256, %s19, [#allocation3], 128, 128, 8
    $region5: #{tpu_custom_call.1} parent=1 // pred_fallthru
      _
    // Predicated region
    $region6: #{tpu_custom_call.1} parent=1 // pred_check
      _
    $region7: #{tpu_custom_call.1} parent=1 // pred_check_branch
      %26 = sbr.rel (0) target = $region9
    $region8: #{tpu_custom_call.1} parent=1 // pred_region
      %s28 = ssub.s32 2048, 2048
      %29 = vsyncadd [#allocation7], %s28
      %s30 = sshll.u32 [#allocation6], 4
      %s31 = int_to_ptr.vmem [resolvable:$true] %s30
      %36 = dma.hbm_to_vmem [thread:$0]  %s1, 2048, %s31, [#allocation7], 128, 128, 8
    $region9: #{tpu_custom_call.1} parent=1 // pred_fallthru
      _
    // Predicated region
    $region10: #{tpu_custom_call.1} parent=1 // pred_check
      _
    $region11: #{tpu_custom_call.1} parent=1 // pred_check_branch
      %38 = sbr.rel (0) target = $region13
    $region12: #{tpu_custom_call.1} parent=1 // pred_region
      %s40 = ssub.s32 128, 128
      %41 = vsyncadd [#allocation7], %s40
      %s43 = sshll.u32 [#allocation8], 4
      %s44 = int_to_ptr.vmem [resolvable:$true] %s43
      %46 = dma.hbm_to_vmem [thread:$0]  %s2, 128, %s44, [#allocation7]
    $region13: #{tpu_custom_call.1} parent=1 // pred_fallthru
      _
    // Predicated region
    $region14: #{tpu_custom_call.1} parent=1 // pred_check
      _
    $region15: #{tpu_custom_call.1} parent=1 // pred_check_branch
      %48 = sbr.rel (0) target = $region17
    $region16: #{tpu_custom_call.1} parent=1 // pred_region
      %s50 = ssub.s32 16, 16
      %51 = vsyncadd [#allocation5], %s50
      %s53 = sshll.u32 %s3, 4
      %s54 = int_to_ptr.vmem [resolvable:$true] %s53
      %56 = dma.vmem_to_smem %s54, 16, [#allocation9], [#allocation5]
    $region17: #{tpu_custom_call.1} parent=1 // pred_fallthru
      _
    // Predicated region
    $region18: #{tpu_custom_call.1} parent=1 // pred_check
      _
    $region19: #{tpu_custom_call.1} parent=1 // pred_check_branch
      %58 = sbr.rel (0) target = $region21
    $region20: #{tpu_custom_call.1} parent=1 // pred_region
      %59 = dma.done [#allocation3], 256
    $region21: #{tpu_custom_call.1} parent=1 // pred_fallthru
      _
    // Predicated region
    $region22: #{tpu_custom_call.1} parent=1 // pred_check
      _
    $region23: #{tpu_custom_call.1} parent=1 // pred_check_branch
      %61 = sbr.rel (0) target = $region25
    $region24: #{tpu_custom_call.1} parent=1 // pred_region
      %62 = dma.done [#allocation7], 2048
    $region25: #{tpu_custom_call.1} parent=1 // pred_fallthru
      _
    // Predicated region
    $region26: #{tpu_custom_call.1} parent=1 // pred_check
      _
    $region27: #{tpu_custom_call.1} parent=1 // pred_check_branch
      %64 = sbr.rel (0) target = $region29
    $region28: #{tpu_custom_call.1} parent=1 // pred_region
      %65 = dma.done [#allocation7], 128
    $region29: #{tpu_custom_call.1} parent=1 // pred_fallthru
      _
    // Predicated region
    $region30: #{tpu_custom_call.1} parent=1 // pred_check
      _
    $region31: #{tpu_custom_call.1} parent=1 // pred_check_branch
      %67 = sbr.rel (0) target = $region33
    $region32: #{tpu_custom_call.1} parent=1 // pred_region
      %68 = dma.done [#allocation5], 16
    $region33: #{tpu_custom_call.1} parent=1 // pred_fallthru
      _
    %69 = sfence
    %v70 = vld [vmem:[#allocation8] sm:$0x7f]
    %v71 = vld [vmem:[#allocation2] sm:$0xff]
    %v72 = vld [vmem:[#allocation2 + $0x8] sm:$0xff]
    %v73 = vld [vmem:[#allocation6] sm:$0xff]
    %v74 = vld [vmem:[#allocation6 + $0x8] sm:$0xff]
    %v75 = vld [vmem:[#allocation6 + $0x10] sm:$0xff]
    %v76 = vld [vmem:[#allocation6 + $0x18] sm:$0xff]
    %v77 = vld [vmem:[#allocation6 + $0x20] sm:$0xff]
    %v78 = vld [vmem:[#allocation6 + $0x28] sm:$0xff]
    %v79 = vld [vmem:[#allocation6 + $0x30] sm:$0xff]
    %v80 = vld [vmem:[#allocation6 + $0x38] sm:$0xff]
    %v81 = vlaneseq
    %v82 = vshrl.u32 %v81, 7
    %v83 = vsub.s32 5, %v82
    %v84 = vrot.slane %v70, %v83
    %vm85 = vcmask 261120
    %v87 = vsel %vm85, %v71, 0
    %v90 = vsel %vm85, %v72, 0
    %92 = vmatprep.subr.mxu0 0.0
    %93 = vmatpush1.msra.mxu0 %v73
    %94 = vmatprep.subr.mxu0 0.0
    %95 = vmatpush1.msra.mxu0 %v74
    %96 = vmatprep.subr.mxu0 0.0
    %97 = vmatpush1.msra.mxu0 %v75
    %98 = vmatprep.subr.mxu0 0.0
    %99 = vmatpush1.msra.mxu0 %v76
    %100 = vmatprep.subr.mxu0 0.0
    %101 = vmatpush1.msra.mxu0 0.0
    %102 = vmatprep.subr.mxu0 0.0
    %103 = vmatpush1.msra.mxu0 0.0
    %104 = vmatprep.subr.mxu0 0.0
    %105 = vmatpush1.msra.mxu0 0.0
    %106 = vmatprep.subr.mxu0 0.0
    %107 = vmatpush1.msra.mxu0 0.0
    %108 = vmatprep.subr.mxu0 0.0
    %109 = vmatpush1.msra.mxu0 0.0
    %110 = vmatprep.subr.mxu0 0.0
    %111 = vmatpush1.msra.mxu0 0.0
    %112 = vmatprep.subr.mxu0 0.0
    %113 = vmatpush1.msra.mxu0 0.0
    %114 = vmatprep.subr.mxu0 0.0
    %115 = vmatpush1.msra.mxu0 0.0
    %116 = vmatprep.subr.mxu0 0.0
    %117 = vmatpush1.msra.mxu0 0.0
    %118 = vmatprep.subr.mxu0 0.0
    %119 = vmatpush1.msra.mxu0 0.0
    %120 = vmatprep.subr.mxu0 0.0
    %121 = vmatpush1.msra.mxu0 0.0
    %122 = vmatprep.subr.mxu0 0.0
    %123 = vmatpush1.msra.mxu0 0.0
    %124 = vmatprep.subr.mxu0 0.0
    %125 = vmatpush1.msra.mxu0 0.0
    %126 = vmatprep.subr.mxu0 0.0
    %127 = vmatpush1.msra.mxu0 0.0
    %128 = vmatprep.subr.mxu0 0.0
    %129 = vmatpush1.msra.mxu0 0.0
    %130 = vmatprep.subr.mxu0 0.0
    %131 = vmatpush1.msra.mxu0 0.0
    %132 = vmatprep.subr.mxu0 0.0
    %133 = vmatpush1.msra.mxu0 0.0
    %134 = vmatprep.subr.mxu0 0.0
    %135 = vmatpush1.msra.mxu0 0.0
    %136 = vmatprep.subr.mxu0 0.0
    %137 = vmatpush1.msra.mxu0 0.0
    %138 = vmatprep.subr.mxu0 0.0
    %139 = vmatpush1.msra.mxu0 0.0
    %140 = vmatprep.subr.mxu0 0.0
    %141 = vmatpush1.msra.mxu0 0.0
    %142 = vmatprep.subr.mxu0 0.0
    %143 = vmatpush1.msra.mxu0 0.0
    %144 = vmatprep.subr.mxu0 0.0
    %145 = vmatpush1.msra.mxu0 0.0
    %146 = vmatprep.subr.mxu0 0.0
    %147 = vmatpush1.msra.mxu0 0.0
    %148 = vmatprep.subr.mxu0 0.0
    %149 = vmatpush1.msra.mxu0 0.0
    %150 = vmatprep.subr.mxu0 0.0
    %151 = vmatpush1.msra.mxu0 0.0
    %152 = vmatprep.subr.mxu0 0.0
    %153 = vmatpush1.msra.mxu0 0.0
    %154 = vmatprep.subr.mxu0 0.0
    %155 = vmatpush1.msra.mxu0 0.0
    %156 = vmatprep.mubr.f32.mxu0 0.0
    %157 = vmatmul.mubr.f32.gmra.mrb[0].mxu0 %v87
    %v158 = vpop.f32.mrb[0].mxu0
    %v159 = vadd.f32 %v84, %v158
    %v160 = vpop.f32.mrb[0].mxu0
    %161 = vmatprep.mubr.f32.mxu0 0.0
    %162 = vmatmul.mubr.f32.gmra.mrb[0].mxu0 %v90
    %v163 = vpop.f32.mrb[0].mxu0
    %v164 = vadd.f32 %v84, %v163
    %v165 = vpop.f32.mrb[0].mxu0
    %166 = vdwg.mxu0
    %v168 = vsel %vm85, 0.0, 0
    %170 = vmatprep.subr.mxu0 0.0
    %171 = vmatpush1.msra.mxu0 %v77
    %172 = vmatprep.subr.mxu0 0.0
    %173 = vmatpush1.msra.mxu0 %v78
    %174 = vmatprep.subr.mxu0 0.0
    %175 = vmatpush1.msra.mxu0 %v79
    %176 = vmatprep.subr.mxu0 0.0
    %177 = vmatpush1.msra.mxu0 %v80
    %178 = vmatprep.subr.mxu0 0.0
    %179 = vmatpush1.msra.mxu0 0.0
    %180 = vmatprep.subr.mxu0 0.0
    %181 = vmatpush1.msra.mxu0 0.0
    %182 = vmatprep.subr.mxu0 0.0
    %183 = vmatpush1.msra.mxu0 0.0
    %184 = vmatprep.subr.mxu0 0.0
    %185 = vmatpush1.msra.mxu0 0.0
    %186 = vmatprep.subr.mxu0 0.0
    %187 = vmatpush1.msra.mxu0 0.0
    %188 = vmatprep.subr.mxu0 0.0
    %189 = vmatpush1.msra.mxu0 0.0
    %190 = vmatprep.subr.mxu0 0.0
    %191 = vmatpush1.msra.mxu0 0.0
    %192 = vmatprep.subr.mxu0 0.0
    %193 = vmatpush1.msra.mxu0 0.0
    %194 = vmatprep.subr.mxu0 0.0
    %195 = vmatpush1.msra.mxu0 0.0
    %196 = vmatprep.subr.mxu0 0.0
    %197 = vmatpush1.msra.mxu0 0.0
    %198 = vmatprep.subr.mxu0 0.0
    %199 = vmatpush1.msra.mxu0 0.0
    %200 = vmatprep.subr.mxu0 0.0
    %201 = vmatpush1.msra.mxu0 0.0
    %202 = vmatprep.subr.mxu0 0.0
    %203 = vmatpush1.msra.mxu0 0.0
    %204 = vmatprep.subr.mxu0 0.0
    %205 = vmatpush1.msra.mxu0 0.0
    %206 = vmatprep.subr.mxu0 0.0
    %207 = vmatpush1.msra.mxu0 0.0
    %208 = vmatprep.subr.mxu0 0.0
    %209 = vmatpush1.msra.mxu0 0.0
    %210 = vmatprep.subr.mxu0 0.0
    %211 = vmatpush1.msra.mxu0 0.0
    %212 = vmatprep.subr.mxu0 0.0
    %213 = vmatpush1.msra.mxu0 0.0
    %214 = vmatprep.subr.mxu0 0.0
    %215 = vmatpush1.msra.mxu0 0.0
    %216 = vmatprep.subr.mxu0 0.0
    %217 = vmatpush1.msra.mxu0 0.0
    %218 = vmatprep.subr.mxu0 0.0
    %219 = vmatpush1.msra.mxu0 0.0
    %220 = vmatprep.subr.mxu0 0.0
    %221 = vmatpush1.msra.mxu0 0.0
    %222 = vmatprep.subr.mxu0 0.0
    %223 = vmatpush1.msra.mxu0 0.0
    %224 = vmatprep.subr.mxu0 0.0
    %225 = vmatpush1.msra.mxu0 0.0
    %226 = vmatprep.subr.mxu0 0.0
    %227 = vmatpush1.msra.mxu0 0.0
    %228 = vmatprep.subr.mxu0 0.0
    %229 = vmatpush1.msra.mxu0 0.0
    %230 = vmatprep.subr.mxu0 0.0
    %231 = vmatpush1.msra.mxu0 0.0
    %232 = vmatprep.subr.mxu0 0.0
    %233 = vmatpush1.msra.mxu0 0.0
    %234 = vmatprep.mubr.f32.mxu0 0.0
    %235 = vmatmul.mubr.f32.gmra.mrb[0].mxu0 %v168
    %v236 = vpop.f32.mrb[0].mxu0
    %v237 = vadd.f32 0.0, %v236
    %v238 = vpop.f32.mrb[0].mxu0
    %239 = vdwg.mxu0
    %v240 = vadd.f32 %v159, %v237
    %v241 = vxor.u32 %v240, 2147483648
    %v242 = vmul.f32 %v241, 1.442695
    %v243 = vpow.pop %v242
    %v244 = vadd.f32 %v243, 1.0
    %v245 = vrcp.pop %v244
    %v246 = vmul.f32 1.0, %v245
    %v247 = vtanh.pop %v240
    %v248 = vmul.f32 %v246, 0.0
    %250 = vrot.lane.b32.xlu0 %v247, 64
    %v251 = vpop.permute.xlu0 %250
    %v253 = vmul.f32 %v246, %v251
    %255 = vrot.lane.b32.xlu0 %v253, 32
    %v256 = vpop.permute.xlu0 %255
    %v258 = vadd.f32 %v248, %v256
    %v259 = vtanh.pop %v258
    %261 = vrot.lane.b32.xlu0 %v259, 64
    %v262 = vpop.permute.xlu0 %261
    %v264 = vmul.f32 %v246, %v262
    %266 = vrot.lane.b32.xlu0 %v264, 32
    %v267 = vpop.permute.xlu0 %266
    %v268 = vsel %vm85, %v267, 0
    %270 = vmatprep.subr.mxu0 0.0
    %271 = vmatpush1.msra.mxu0 %v77
    %272 = vmatprep.subr.mxu0 0.0
    %273 = vmatpush1.msra.mxu0 %v78
    %274 = vmatprep.subr.mxu0 0.0
    %275 = vmatpush1.msra.mxu0 %v79
    %276 = vmatprep.subr.mxu0 0.0
    %277 = vmatpush1.msra.mxu0 %v80
    %278 = vmatprep.subr.mxu0 0.0
    %279 = vmatpush1.msra.mxu0 0.0
    %280 = vmatprep.subr.mxu0 0.0
    %281 = vmatpush1.msra.mxu0 0.0
    %282 = vmatprep.subr.mxu0 0.0
    %283 = vmatpush1.msra.mxu0 0.0
    %284 = vmatprep.subr.mxu0 0.0
    %285 = vmatpush1.msra.mxu0 0.0
    %286 = vmatprep.subr.mxu0 0.0
    %287 = vmatpush1.msra.mxu0 0.0
    %288 = vmatprep.subr.mxu0 0.0
    %289 = vmatpush1.msra.mxu0 0.0
    %290 = vmatprep.subr.mxu0 0.0
    %291 = vmatpush1.msra.mxu0 0.0
    %292 = vmatprep.subr.mxu0 0.0
    %293 = vmatpush1.msra.mxu0 0.0
    %294 = vmatprep.subr.mxu0 0.0
    %295 = vmatpush1.msra.mxu0 0.0
    %296 = vmatprep.subr.mxu0 0.0
    %297 = vmatpush1.msra.mxu0 0.0
    %298 = vmatprep.subr.mxu0 0.0
    %299 = vmatpush1.msra.mxu0 0.0
    %300 = vmatprep.subr.mxu0 0.0
    %301 = vmatpush1.msra.mxu0 0.0
    %302 = vmatprep.subr.mxu0 0.0
    %303 = vmatpush1.msra.mxu0 0.0
    %304 = vmatprep.subr.mxu0 0.0
    %305 = vmatpush1.msra.mxu0 0.0
    %306 = vmatprep.subr.mxu0 0.0
    %307 = vmatpush1.msra.mxu0 0.0
    %308 = vmatprep.subr.mxu0 0.0
    %309 = vmatpush1.msra.mxu0 0.0
    %310 = vmatprep.subr.mxu0 0.0
    %311 = vmatpush1.msra.mxu0 0.0
    %312 = vmatprep.subr.mxu0 0.0
    %313 = vmatpush1.msra.mxu0 0.0
    %314 = vmatprep.subr.mxu0 0.0
    %315 = vmatpush1.msra.mxu0 0.0
    %316 = vmatprep.subr.mxu0 0.0
    %317 = vmatpush1.msra.mxu0 0.0
    %318 = vmatprep.subr.mxu0 0.0
    %319 = vmatpush1.msra.mxu0 0.0
    %320 = vmatprep.subr.mxu0 0.0
    %321 = vmatpush1.msra.mxu0 0.0
    %322 = vmatprep.subr.mxu0 0.0
    %323 = vmatpush1.msra.mxu0 0.0
    %324 = vmatprep.subr.mxu0 0.0
    %325 = vmatpush1.msra.mxu0 0.0
    %326 = vmatprep.subr.mxu0 0.0
    %327 = vmatpush1.msra.mxu0 0.0
    %328 = vmatprep.subr.mxu0 0.0
    %329 = vmatpush1.msra.mxu0 0.0
    %330 = vmatprep.subr.mxu0 0.0
    %331 = vmatpush1.msra.mxu0 0.0
    %332 = vmatprep.subr.mxu0 0.0
    %333 = vmatpush1.msra.mxu0 0.0
    %334 = vmatprep.mubr.f32.mxu0 0.0
    %335 = vmatmul.mubr.f32.gmra.mrb[0].mxu0 %v268
    %v336 = vpop.f32.mrb[0].mxu0
    %v337 = vadd.f32 0.0, %v336
    %v338 = vpop.f32.mrb[0].mxu0
    %339 = vdwg.mxu0
    %v341 = vrot.slane %v337, 6
    %v343 = vadd.f32 %v159, %v341
    %v344 = vxor.u32 %v343, 2147483648
    %v345 = vmul.f32 %v344, 1.442695
    %v346 = vpow.pop %v345
    %v347 = vadd.f32 %v346, 1.0
    %v348 = vrcp.pop %v347
    %v349 = vmul.f32 1.0, %v348
    %v350 = vtanh.pop %v343
    %v352 = vrot.slane %v258, 6
    %v354 = vmul.f32 %v349, %v352
    %356 = vrot.lane.b32.xlu0 %v350, 64
    %v357 = vpop.permute.xlu0 %356
    %v359 = vmul.f32 %v349, %v357
    %361 = vrot.lane.b32.xlu0 %v359, 32
    %v362 = vpop.permute.xlu0 %361
    %v364 = vadd.f32 %v354, %v362
    %v365 = vtanh.pop %v364
    %367 = vrot.lane.b32.xlu0 %v365, 64
    %v368 = vpop.permute.xlu0 %367
    %v370 = vmul.f32 %v349, %v368
    %v372 = vrot.slane %v370, 2
    %373 = vrot.lane.b32.xlu0 %v372, 32
    %v374 = vpop.permute.xlu0 %373
    %v375 = vsel %vm85, %v374, 0
    %377 = vmatprep.subr.mxu0 0.0
    %378 = vmatpush1.msra.mxu0 %v77
    %379 = vmatprep.subr.mxu0 0.0
    %380 = vmatpush1.msra.mxu0 %v78
    %381 = vmatprep.subr.mxu0 0.0
    %382 = vmatpush1.msra.mxu0 %v79
    %383 = vmatprep.subr.mxu0 0.0
    %384 = vmatpush1.msra.mxu0 %v80
    %385 = vmatprep.subr.mxu0 0.0
    %386 = vmatpush1.msra.mxu0 0.0
    %387 = vmatprep.subr.mxu0 0.0
    %388 = vmatpush1.msra.mxu0 0.0
    %389 = vmatprep.subr.mxu0 0.0
    %390 = vmatpush1.msra.mxu0 0.0
    %391 = vmatprep.subr.mxu0 0.0
    %392 = vmatpush1.msra.mxu0 0.0
    %393 = vmatprep.subr.mxu0 0.0
    %394 = vmatpush1.msra.mxu0 0.0
    %395 = vmatprep.subr.mxu0 0.0
    %396 = vmatpush1.msra.mxu0 0.0
    %397 = vmatprep.subr.mxu0 0.0
    %398 = vmatpush1.msra.mxu0 0.0
    %399 = vmatprep.subr.mxu0 0.0
    %400 = vmatpush1.msra.mxu0 0.0
    %401 = vmatprep.subr.mxu0 0.0
    %402 = vmatpush1.msra.mxu0 0.0
    %403 = vmatprep.subr.mxu0 0.0
    %404 = vmatpush1.msra.mxu0 0.0
    %405 = vmatprep.subr.mxu0 0.0
    %406 = vmatpush1.msra.mxu0 0.0
    %407 = vmatprep.subr.mxu0 0.0
    %408 = vmatpush1.msra.mxu0 0.0
    %409 = vmatprep.subr.mxu0 0.0
    %410 = vmatpush1.msra.mxu0 0.0
    %411 = vmatprep.subr.mxu0 0.0
    %412 = vmatpush1.msra.mxu0 0.0
    %413 = vmatprep.subr.mxu0 0.0
    %414 = vmatpush1.msra.mxu0 0.0
    %415 = vmatprep.subr.mxu0 0.0
    %416 = vmatpush1.msra.mxu0 0.0
    %417 = vmatprep.subr.mxu0 0.0
    %418 = vmatpush1.msra.mxu0 0.0
    %419 = vmatprep.subr.mxu0 0.0
    %420 = vmatpush1.msra.mxu0 0.0
    %421 = vmatprep.subr.mxu0 0.0
    %422 = vmatpush1.msra.mxu0 0.0
    %423 = vmatprep.subr.mxu0 0.0
    %424 = vmatpush1.msra.mxu0 0.0
    %425 = vmatprep.subr.mxu0 0.0
    %426 = vmatpush1.msra.mxu0 0.0
    %427 = vmatprep.subr.mxu0 0.0
    %428 = vmatpush1.msra.mxu0 0.0
    %429 = vmatprep.subr.mxu0 0.0
    %430 = vmatpush1.msra.mxu0 0.0
    %431 = vmatprep.subr.mxu0 0.0
    %432 = vmatpush1.msra.mxu0 0.0
    %433 = vmatprep.subr.mxu0 0.0
    %434 = vmatpush1.msra.mxu0 0.0
    %435 = vmatprep.subr.mxu0 0.0
    %436 = vmatpush1.msra.mxu0 0.0
    %437 = vmatprep.subr.mxu0 0.0
    %438 = vmatpush1.msra.mxu0 0.0
    %439 = vmatprep.subr.mxu0 0.0
    %440 = vmatpush1.msra.mxu0 0.0
    %441 = vmatprep.mubr.f32.mxu0 0.0
    %442 = vmatmul.mubr.f32.gmra.mrb[0].mxu0 %v375
    %v443 = vpop.f32.mrb[0].mxu0
    %v444 = vadd.f32 0.0, %v443
    %v445 = vpop.f32.mrb[0].mxu0
    %446 = vdwg.mxu0
    %v448 = vrot.slane %v444, 4
    %v450 = vadd.f32 %v159, %v448
    %v451 = vxor.u32 %v450, 2147483648
    %v452 = vmul.f32 %v451, 1.442695
    %v453 = vpow.pop %v452
    %v454 = vadd.f32 %v453, 1.0
    %v455 = vrcp.pop %v454
    %v456 = vmul.f32 1.0, %v455
    %v457 = vtanh.pop %v450
    %v459 = vrot.slane %v364, 6
    %v461 = vmul.f32 %v456, %v459
    %463 = vrot.lane.b32.xlu0 %v457, 64
    %v464 = vpop.permute.xlu0 %463
    %v466 = vmul.f32 %v456, %v464
    %468 = vrot.lane.b32.xlu0 %v466, 32
    %v469 = vpop.permute.xlu0 %468
    %v471 = vadd.f32 %v461, %v469
    %v472 = vtanh.pop %v471
    %474 = vrot.lane.b32.xlu0 %v472, 64
    %v475 = vpop.permute.xlu0 %474
    %v477 = vmul.f32 %v456, %v475
    %v479 = vrot.slane %v477, 4
    %480 = vrot.lane.b32.xlu0 %v479, 32
    %v481 = vpop.permute.xlu0 %480
    %v482 = vsel %vm85, %v481, 0
    %484 = vmatprep.subr.mxu0 0.0
    %485 = vmatpush1.msra.mxu0 %v77
    %486 = vmatprep.subr.mxu0 0.0
    %487 = vmatpush1.msra.mxu0 %v78
    %488 = vmatprep.subr.mxu0 0.0
    %489 = vmatpush1.msra.mxu0 %v79
    %490 = vmatprep.subr.mxu0 0.0
    %491 = vmatpush1.msra.mxu0 %v80
    %492 = vmatprep.subr.mxu0 0.0
    %493 = vmatpush1.msra.mxu0 0.0
    %494 = vmatprep.subr.mxu0 0.0
    %495 = vmatpush1.msra.mxu0 0.0
    %496 = vmatprep.subr.mxu0 0.0
    %497 = vmatpush1.msra.mxu0 0.0
    %498 = vmatprep.subr.mxu0 0.0
    %499 = vmatpush1.msra.mxu0 0.0
    %500 = vmatprep.subr.mxu0 0.0
    %501 = vmatpush1.msra.mxu0 0.0
    %502 = vmatprep.subr.mxu0 0.0
    %503 = vmatpush1.msra.mxu0 0.0
    %504 = vmatprep.subr.mxu0 0.0
    %505 = vmatpush1.msra.mxu0 0.0
    %506 = vmatprep.subr.mxu0 0.0
    %507 = vmatpush1.msra.mxu0 0.0
    %508 = vmatprep.subr.mxu0 0.0
    %509 = vmatpush1.msra.mxu0 0.0
    %510 = vmatprep.subr.mxu0 0.0
    %511 = vmatpush1.msra.mxu0 0.0
    %512 = vmatprep.subr.mxu0 0.0
    %513 = vmatpush1.msra.mxu0 0.0
    %514 = vmatprep.subr.mxu0 0.0
    %515 = vmatpush1.msra.mxu0 0.0
    %516 = vmatprep.subr.mxu0 0.0
    %517 = vmatpush1.msra.mxu0 0.0
    %518 = vmatprep.subr.mxu0 0.0
    %519 = vmatpush1.msra.mxu0 0.0
    %520 = vmatprep.subr.mxu0 0.0
    %521 = vmatpush1.msra.mxu0 0.0
    %522 = vmatprep.subr.mxu0 0.0
    %523 = vmatpush1.msra.mxu0 0.0
    %524 = vmatprep.subr.mxu0 0.0
    %525 = vmatpush1.msra.mxu0 0.0
    %526 = vmatprep.subr.mxu0 0.0
    %527 = vmatpush1.msra.mxu0 0.0
    %528 = vmatprep.subr.mxu0 0.0
    %529 = vmatpush1.msra.mxu0 0.0
    %530 = vmatprep.subr.mxu0 0.0
    %531 = vmatpush1.msra.mxu0 0.0
    %532 = vmatprep.subr.mxu0 0.0
    %533 = vmatpush1.msra.mxu0 0.0
    %534 = vmatprep.subr.mxu0 0.0
    %535 = vmatpush1.msra.mxu0 0.0
    %536 = vmatprep.subr.mxu0 0.0
    %537 = vmatpush1.msra.mxu0 0.0
    %538 = vmatprep.subr.mxu0 0.0
    %539 = vmatpush1.msra.mxu0 0.0
    %540 = vmatprep.subr.mxu0 0.0
    %541 = vmatpush1.msra.mxu0 0.0
    %542 = vmatprep.subr.mxu0 0.0
    %543 = vmatpush1.msra.mxu0 0.0
    %544 = vmatprep.subr.mxu0 0.0
    %545 = vmatpush1.msra.mxu0 0.0
    %546 = vmatprep.subr.mxu0 0.0
    %547 = vmatpush1.msra.mxu0 0.0
    %548 = vmatprep.mubr.f32.mxu0 0.0
    %549 = vmatmul.mubr.f32.gmra.mrb[0].mxu0 %v482
    %v550 = vpop.f32.mrb[0].mxu0
    %v551 = vadd.f32 0.0, %v550
    %v552 = vpop.f32.mrb[0].mxu0
    %553 = vdwg.mxu0
    %v555 = vrot.slane %v551, 2
    %v557 = vadd.f32 %v159, %v555
    %v558 = vxor.u32 %v557, 2147483648
    %v559 = vmul.f32 %v558, 1.442695
    %v560 = vpow.pop %v559
    %v561 = vadd.f32 %v560, 1.0
    %v562 = vrcp.pop %v561
    %v563 = vmul.f32 1.0, %v562
    %v564 = vtanh.pop %v557
    %v566 = vrot.slane %v471, 6
    %v568 = vmul.f32 %v563, %v566
    %570 = vrot.lane.b32.xlu0 %v564, 64
    %v571 = vpop.permute.xlu0 %570
    %v573 = vmul.f32 %v563, %v571
    %575 = vrot.lane.b32.xlu0 %v573, 32
    %v576 = vpop.permute.xlu0 %575
    %v578 = vadd.f32 %v568, %v576
    %v579 = vtanh.pop %v578
    %581 = vrot.lane.b32.xlu0 %v579, 64
    %v582 = vpop.permute.xlu0 %581
    %v584 = vmul.f32 %v563, %v582
    %v586 = vrot.slane %v584, 6
    %587 = vrot.lane.b32.xlu0 %v586, 32
    %v588 = vpop.permute.xlu0 %587
    %v589 = vsel %vm85, %v588, 0
    %591 = vmatprep.subr.mxu0 0.0
    %592 = vmatpush1.msra.mxu0 %v77
    %593 = vmatprep.subr.mxu0 0.0
    %594 = vmatpush1.msra.mxu0 %v78
    %595 = vmatprep.subr.mxu0 0.0
    %596 = vmatpush1.msra.mxu0 %v79
    %597 = vmatprep.subr.mxu0 0.0
    %598 = vmatpush1.msra.mxu0 %v80
    %599 = vmatprep.subr.mxu0 0.0
    %600 = vmatpush1.msra.mxu0 0.0
    %601 = vmatprep.subr.mxu0 0.0
    %602 = vmatpush1.msra.mxu0 0.0
    %603 = vmatprep.subr.mxu0 0.0
    %604 = vmatpush1.msra.mxu0 0.0
    %605 = vmatprep.subr.mxu0 0.0
    %606 = vmatpush1.msra.mxu0 0.0
    %607 = vmatprep.subr.mxu0 0.0
    %608 = vmatpush1.msra.mxu0 0.0
    %609 = vmatprep.subr.mxu0 0.0
    %610 = vmatpush1.msra.mxu0 0.0
    %611 = vmatprep.subr.mxu0 0.0
    %612 = vmatpush1.msra.mxu0 0.0
    %613 = vmatprep.subr.mxu0 0.0
    %614 = vmatpush1.msra.mxu0 0.0
    %615 = vmatprep.subr.mxu0 0.0
    %616 = vmatpush1.msra.mxu0 0.0
    %617 = vmatprep.subr.mxu0 0.0
    %618 = vmatpush1.msra.mxu0 0.0
    %619 = vmatprep.subr.mxu0 0.0
    %620 = vmatpush1.msra.mxu0 0.0
    %621 = vmatprep.subr.mxu0 0.0
    %622 = vmatpush1.msra.mxu0 0.0
    %623 = vmatprep.subr.mxu0 0.0
    %624 = vmatpush1.msra.mxu0 0.0
    %625 = vmatprep.subr.mxu0 0.0
    %626 = vmatpush1.msra.mxu0 0.0
    %627 = vmatprep.subr.mxu0 0.0
    %628 = vmatpush1.msra.mxu0 0.0
    %629 = vmatprep.subr.mxu0 0.0
    %630 = vmatpush1.msra.mxu0 0.0
    %631 = vmatprep.subr.mxu0 0.0
    %632 = vmatpush1.msra.mxu0 0.0
    %633 = vmatprep.subr.mxu0 0.0
    %634 = vmatpush1.msra.mxu0 0.0
    %635 = vmatprep.subr.mxu0 0.0
    %636 = vmatpush1.msra.mxu0 0.0
    %637 = vmatprep.subr.mxu0 0.0
    %638 = vmatpush1.msra.mxu0 0.0
    %639 = vmatprep.subr.mxu0 0.0
    %640 = vmatpush1.msra.mxu0 0.0
    %641 = vmatprep.subr.mxu0 0.0
    %642 = vmatpush1.msra.mxu0 0.0
    %643 = vmatprep.subr.mxu0 0.0
    %644 = vmatpush1.msra.mxu0 0.0
    %645 = vmatprep.subr.mxu0 0.0
    %646 = vmatpush1.msra.mxu0 0.0
    %647 = vmatprep.subr.mxu0 0.0
    %648 = vmatpush1.msra.mxu0 0.0
    %649 = vmatprep.subr.mxu0 0.0
    %650 = vmatpush1.msra.mxu0 0.0
    %651 = vmatprep.subr.mxu0 0.0
    %652 = vmatpush1.msra.mxu0 0.0
    %653 = vmatprep.subr.mxu0 0.0
    %654 = vmatpush1.msra.mxu0 0.0
    %655 = vmatprep.mubr.f32.mxu0 0.0
    %656 = vmatmul.mubr.f32.gmra.mrb[0].mxu0 %v589
    %v657 = vpop.f32.mrb[0].mxu0
    %v658 = vadd.f32 0.0, %v657
    %v659 = vpop.f32.mrb[0].mxu0
    %660 = vdwg.mxu0
    %v661 = vadd.f32 %v164, %v658
    %v662 = vxor.u32 %v661, 2147483648
    %v663 = vmul.f32 %v662, 1.442695
    %v664 = vpow.pop %v663
    %v665 = vadd.f32 %v664, 1.0
    %v666 = vrcp.pop %v665
    %v667 = vmul.f32 1.0, %v666
    %v668 = vtanh.pop %v661
    %v670 = vrot.slane %v578, 6
    %v672 = vmul.f32 %v667, %v670
    %674 = vrot.lane.b32.xlu0 %v668, 64
    %v675 = vpop.permute.xlu0 %674
    %v677 = vmul.f32 %v667, %v675
    %679 = vrot.lane.b32.xlu0 %v677, 32
    %v680 = vpop.permute.xlu0 %679
    %v682 = vadd.f32 %v672, %v680
    %v683 = vtanh.pop %v682
    %685 = vrot.lane.b32.xlu0 %v683, 64
    %v686 = vpop.permute.xlu0 %685
    %v688 = vmul.f32 %v667, %v686
    %690 = vrot.lane.b32.xlu0 %v688, 32
    %v691 = vpop.permute.xlu0 %690
    %v692 = vsel %vm85, %v691, 0
    %694 = vmatprep.subr.mxu0 0.0
    %695 = vmatpush1.msra.mxu0 %v77
    %696 = vmatprep.subr.mxu0 0.0
    %697 = vmatpush1.msra.mxu0 %v78
    %698 = vmatprep.subr.mxu0 0.0
    %699 = vmatpush1.msra.mxu0 %v79
    %700 = vmatprep.subr.mxu0 0.0
    %701 = vmatpush1.msra.mxu0 %v80
    %702 = vmatprep.subr.mxu0 0.0
    %703 = vmatpush1.msra.mxu0 0.0
    %704 = vmatprep.subr.mxu0 0.0
    %705 = vmatpush1.msra.mxu0 0.0
    %706 = vmatprep.subr.mxu0 0.0
    %707 = vmatpush1.msra.mxu0 0.0
    %708 = vmatprep.subr.mxu0 0.0
    %709 = vmatpush1.msra.mxu0 0.0
    %710 = vmatprep.subr.mxu0 0.0
    %711 = vmatpush1.msra.mxu0 0.0
    %712 = vmatprep.subr.mxu0 0.0
    %713 = vmatpush1.msra.mxu0 0.0
    %714 = vmatprep.subr.mxu0 0.0
    %715 = vmatpush1.msra.mxu0 0.0
    %716 = vmatprep.subr.mxu0 0.0
    %717 = vmatpush1.msra.mxu0 0.0
    %718 = vmatprep.subr.mxu0 0.0
    %719 = vmatpush1.msra.mxu0 0.0
    %720 = vmatprep.subr.mxu0 0.0
    %721 = vmatpush1.msra.mxu0 0.0
    %722 = vmatprep.subr.mxu0 0.0
    %723 = vmatpush1.msra.mxu0 0.0
    %724 = vmatprep.subr.mxu0 0.0
    %725 = vmatpush1.msra.mxu0 0.0
    %726 = vmatprep.subr.mxu0 0.0
    %727 = vmatpush1.msra.mxu0 0.0
    %728 = vmatprep.subr.mxu0 0.0
    %729 = vmatpush1.msra.mxu0 0.0
    %730 = vmatprep.subr.mxu0 0.0
    %731 = vmatpush1.msra.mxu0 0.0
    %732 = vmatprep.subr.mxu0 0.0
    %733 = vmatpush1.msra.mxu0 0.0
    %734 = vmatprep.subr.mxu0 0.0
    %735 = vmatpush1.msra.mxu0 0.0
    %736 = vmatprep.subr.mxu0 0.0
    %737 = vmatpush1.msra.mxu0 0.0
    %738 = vmatprep.subr.mxu0 0.0
    %739 = vmatpush1.msra.mxu0 0.0
    %740 = vmatprep.subr.mxu0 0.0
    %741 = vmatpush1.msra.mxu0 0.0
    %742 = vmatprep.subr.mxu0 0.0
    %743 = vmatpush1.msra.mxu0 0.0
    %744 = vmatprep.subr.mxu0 0.0
    %745 = vmatpush1.msra.mxu0 0.0
    %746 = vmatprep.subr.mxu0 0.0
    %747 = vmatpush1.msra.mxu0 0.0
    %748 = vmatprep.subr.mxu0 0.0
    %749 = vmatpush1.msra.mxu0 0.0
    %750 = vmatprep.subr.mxu0 0.0
    %751 = vmatpush1.msra.mxu0 0.0
    %752 = vmatprep.subr.mxu0 0.0
    %753 = vmatpush1.msra.mxu0 0.0
    %754 = vmatprep.subr.mxu0 0.0
    %755 = vmatpush1.msra.mxu0 0.0
    %756 = vmatprep.subr.mxu0 0.0
    %757 = vmatpush1.msra.mxu0 0.0
    %758 = vmatprep.mubr.f32.mxu0 0.0
    %759 = vmatmul.mubr.f32.gmra.mrb[0].mxu0 %v692
    %v760 = vpop.f32.mrb[0].mxu0
    %v761 = vadd.f32 0.0, %v760
    %v762 = vpop.f32.mrb[0].mxu0
    %763 = vdwg.mxu0
    %v765 = vrot.slane %v761, 6
    %v767 = vadd.f32 %v164, %v765
    %v768 = vxor.u32 %v767, 2147483648
    %v769 = vmul.f32 %v768, 1.442695
    %v770 = vpow.pop %v769
    %v771 = vadd.f32 %v770, 1.0
    %v772 = vrcp.pop %v771
    %v773 = vmul.f32 1.0, %v772
    %v774 = vtanh.pop %v767
    %v776 = vrot.slane %v682, 6
    %v778 = vmul.f32 %v773, %v776
    %780 = vrot.lane.b32.xlu0 %v774, 64
    %v781 = vpop.permute.xlu0 %780
    %v783 = vmul.f32 %v773, %v781
    %785 = vrot.lane.b32.xlu0 %v783, 32
    %v786 = vpop.permute.xlu0 %785
    %v788 = vadd.f32 %v778, %v786
    %v789 = vtanh.pop %v788
    %791 = vrot.lane.b32.xlu0 %v789, 64
    %v792 = vpop.permute.xlu0 %791
    %v794 = vmul.f32 %v773, %v792
    %v796 = vrot.slane %v794, 2
    %797 = vrot.lane.b32.xlu0 %v796, 32
    %v798 = vpop.permute.xlu0 %797
    %v799 = vsel %vm85, %v798, 0
    %801 = vmatprep.subr.mxu0 0.0
    %802 = vmatpush1.msra.mxu0 %v77
    %803 = vmatprep.subr.mxu0 0.0
    %804 = vmatpush1.msra.mxu0 %v78
    %805 = vmatprep.subr.mxu0 0.0
    %806 = vmatpush1.msra.mxu0 %v79
    %807 = vmatprep.subr.mxu0 0.0
    %808 = vmatpush1.msra.mxu0 %v80
    %809 = vmatprep.subr.mxu0 0.0
    %810 = vmatpush1.msra.mxu0 0.0
    %811 = vmatprep.subr.mxu0 0.0
    %812 = vmatpush1.msra.mxu0 0.0
    %813 = vmatprep.subr.mxu0 0.0
    %814 = vmatpush1.msra.mxu0 0.0
    %815 = vmatprep.subr.mxu0 0.0
    %816 = vmatpush1.msra.mxu0 0.0
    %817 = vmatprep.subr.mxu0 0.0
    %818 = vmatpush1.msra.mxu0 0.0
    %819 = vmatprep.subr.mxu0 0.0
    %820 = vmatpush1.msra.mxu0 0.0
    %821 = vmatprep.subr.mxu0 0.0
    %822 = vmatpush1.msra.mxu0 0.0
    %823 = vmatprep.subr.mxu0 0.0
    %824 = vmatpush1.msra.mxu0 0.0
    %825 = vmatprep.subr.mxu0 0.0
    %826 = vmatpush1.msra.mxu0 0.0
    %827 = vmatprep.subr.mxu0 0.0
    %828 = vmatpush1.msra.mxu0 0.0
    %829 = vmatprep.subr.mxu0 0.0
    %830 = vmatpush1.msra.mxu0 0.0
    %831 = vmatprep.subr.mxu0 0.0
    %832 = vmatpush1.msra.mxu0 0.0
    %833 = vmatprep.subr.mxu0 0.0
    %834 = vmatpush1.msra.mxu0 0.0
    %835 = vmatprep.subr.mxu0 0.0
    %836 = vmatpush1.msra.mxu0 0.0
    %837 = vmatprep.subr.mxu0 0.0
    %838 = vmatpush1.msra.mxu0 0.0
    %839 = vmatprep.subr.mxu0 0.0
    %840 = vmatpush1.msra.mxu0 0.0
    %841 = vmatprep.subr.mxu0 0.0
    %842 = vmatpush1.msra.mxu0 0.0
    %843 = vmatprep.subr.mxu0 0.0
    %844 = vmatpush1.msra.mxu0 0.0
    %845 = vmatprep.subr.mxu0 0.0
    %846 = vmatpush1.msra.mxu0 0.0
    %847 = vmatprep.subr.mxu0 0.0
    %848 = vmatpush1.msra.mxu0 0.0
    %849 = vmatprep.subr.mxu0 0.0
    %850 = vmatpush1.msra.mxu0 0.0
    %851 = vmatprep.subr.mxu0 0.0
    %852 = vmatpush1.msra.mxu0 0.0
    %853 = vmatprep.subr.mxu0 0.0
    %854 = vmatpush1.msra.mxu0 0.0
    %855 = vmatprep.subr.mxu0 0.0
    %856 = vmatpush1.msra.mxu0 0.0
    %857 = vmatprep.subr.mxu0 0.0
    %858 = vmatpush1.msra.mxu0 0.0
    %859 = vmatprep.subr.mxu0 0.0
    %860 = vmatpush1.msra.mxu0 0.0
    %861 = vmatprep.subr.mxu0 0.0
    %862 = vmatpush1.msra.mxu0 0.0
    %863 = vmatprep.subr.mxu0 0.0
    %864 = vmatpush1.msra.mxu0 0.0
    %865 = vmatprep.mubr.f32.mxu0 0.0
    %866 = vmatmul.mubr.f32.gmra.mrb[0].mxu0 %v799
    %v867 = vpop.f32.mrb[0].mxu0
    %v868 = vadd.f32 0.0, %v867
    %v869 = vpop.f32.mrb[0].mxu0
    %870 = vdwg.mxu0
    %v872 = vrot.slane %v868, 4
    %v874 = vadd.f32 %v164, %v872
    %v875 = vxor.u32 %v874, 2147483648
    %v876 = vmul.f32 %v875, 1.442695
    %v877 = vpow.pop %v876
    %v878 = vadd.f32 %v877, 1.0
    %v879 = vrcp.pop %v878
    %v880 = vmul.f32 1.0, %v879
    %v881 = vtanh.pop %v874
    %v883 = vrot.slane %v788, 6
    %v885 = vmul.f32 %v880, %v883
    %887 = vrot.lane.b32.xlu0 %v881, 64
    %v888 = vpop.permute.xlu0 %887
    %v890 = vmul.f32 %v880, %v888
    %892 = vrot.lane.b32.xlu0 %v890, 32
    %v893 = vpop.permute.xlu0 %892
    %v895 = vadd.f32 %v885, %v893
    %v896 = vtanh.pop %v895
    %898 = vrot.lane.b32.xlu0 %v896, 64
    %v899 = vpop.permute.xlu0 %898
    %v901 = vmul.f32 %v880, %v899
    %v903 = vrot.slane %v901, 4
    %904 = vrot.lane.b32.xlu0 %v903, 32
    %v905 = vpop.permute.xlu0 %904
    %v906 = vsel %vm85, %v905, 0
    %908 = vmatprep.subr.mxu0 0.0
    %909 = vmatpush1.msra.mxu0 %v77
    %910 = vmatprep.subr.mxu0 0.0
    %911 = vmatpush1.msra.mxu0 %v78
    %912 = vmatprep.subr.mxu0 0.0
    %913 = vmatpush1.msra.mxu0 %v79
    %914 = vmatprep.subr.mxu0 0.0
    %915 = vmatpush1.msra.mxu0 %v80
    %916 = vmatprep.subr.mxu0 0.0
    %917 = vmatpush1.msra.mxu0 0.0
    %918 = vmatprep.subr.mxu0 0.0
    %919 = vmatpush1.msra.mxu0 0.0
    %920 = vmatprep.subr.mxu0 0.0
    %921 = vmatpush1.msra.mxu0 0.0
    %922 = vmatprep.subr.mxu0 0.0
    %923 = vmatpush1.msra.mxu0 0.0
    %924 = vmatprep.subr.mxu0 0.0
    %925 = vmatpush1.msra.mxu0 0.0
    %926 = vmatprep.subr.mxu0 0.0
    %927 = vmatpush1.msra.mxu0 0.0
    %928 = vmatprep.subr.mxu0 0.0
    %929 = vmatpush1.msra.mxu0 0.0
    %930 = vmatprep.subr.mxu0 0.0
    %931 = vmatpush1.msra.mxu0 0.0
    %932 = vmatprep.subr.mxu0 0.0
    %933 = vmatpush1.msra.mxu0 0.0
    %934 = vmatprep.subr.mxu0 0.0
    %935 = vmatpush1.msra.mxu0 0.0
    %936 = vmatprep.subr.mxu0 0.0
    %937 = vmatpush1.msra.mxu0 0.0
    %938 = vmatprep.subr.mxu0 0.0
    %939 = vmatpush1.msra.mxu0 0.0
    %940 = vmatprep.subr.mxu0 0.0
    %941 = vmatpush1.msra.mxu0 0.0
    %942 = vmatprep.subr.mxu0 0.0
    %943 = vmatpush1.msra.mxu0 0.0
    %944 = vmatprep.subr.mxu0 0.0
    %945 = vmatpush1.msra.mxu0 0.0
    %946 = vmatprep.subr.mxu0 0.0
    %947 = vmatpush1.msra.mxu0 0.0
    %948 = vmatprep.subr.mxu0 0.0
    %949 = vmatpush1.msra.mxu0 0.0
    %950 = vmatprep.subr.mxu0 0.0
    %951 = vmatpush1.msra.mxu0 0.0
    %952 = vmatprep.subr.mxu0 0.0
    %953 = vmatpush1.msra.mxu0 0.0
    %954 = vmatprep.subr.mxu0 0.0
    %955 = vmatpush1.msra.mxu0 0.0
    %956 = vmatprep.subr.mxu0 0.0
    %957 = vmatpush1.msra.mxu0 0.0
    %958 = vmatprep.subr.mxu0 0.0
    %959 = vmatpush1.msra.mxu0 0.0
    %960 = vmatprep.subr.mxu0 0.0
    %961 = vmatpush1.msra.mxu0 0.0
    %962 = vmatprep.subr.mxu0 0.0
    %963 = vmatpush1.msra.mxu0 0.0
    %964 = vmatprep.subr.mxu0 0.0
    %965 = vmatpush1.msra.mxu0 0.0
    %966 = vmatprep.subr.mxu0 0.0
    %967 = vmatpush1.msra.mxu0 0.0
    %968 = vmatprep.subr.mxu0 0.0
    %969 = vmatpush1.msra.mxu0 0.0
    %970 = vmatprep.subr.mxu0 0.0
    %971 = vmatpush1.msra.mxu0 0.0
    %972 = vmatprep.mubr.f32.mxu0 0.0
    %973 = vmatmul.mubr.f32.gmra.mrb[0].mxu0 %v906
    %v974 = vpop.f32.mrb[0].mxu0
    %v975 = vadd.f32 0.0, %v974
    %v976 = vpop.f32.mrb[0].mxu0
    %977 = vdwg.mxu0
    %v979 = vrot.slane %v975, 2
    %v981 = vadd.f32 %v164, %v979
    %v982 = vxor.u32 %v981, 2147483648
    %v983 = vmul.f32 %v982, 1.442695
    %v984 = vpow.pop %v983
    %v985 = vadd.f32 %v984, 1.0
    %v986 = vrcp.pop %v985
    %v987 = vmul.f32 1.0, %v986
    %v988 = vtanh.pop %v981
    %v990 = vrot.slane %v895, 6
    %v992 = vmul.f32 %v987, %v990
    %994 = vrot.lane.b32.xlu0 %v988, 64
    %v995 = vpop.permute.xlu0 %994
    %v997 = vmul.f32 %v987, %v995
    %999 = vrot.lane.b32.xlu0 %v997, 32
    %v1000 = vpop.permute.xlu0 %999
    %v1002 = vadd.f32 %v992, %v1000
    %v1003 = vtanh.pop %v1002
    %1005 = vrot.lane.b32.xlu0 %v1003, 64
    %v1006 = vpop.permute.xlu0 %1005
    %v1008 = vmul.f32 %v987, %v1006
    %vm1009 = vcmask 1041408
    %v1010 = vsel %vm1009, %v264, %v370
    %vm1011 = vcmask 1043456
    %v1012 = vsel %vm1011, %v1010, %v477
    %vm1013 = vcmask 1045504
    %v1014 = vsel %vm1013, %v1012, %v584
    %v1015 = vsel %vm1009, %v688, %v794
    %v1016 = vsel %vm1011, %v1015, %v901
    %v1017 = vsel %vm1013, %v1016, %v1008
    %s1018 = scalar_lea.vmem [#allocation6], 64
    %v1019 = vld [vmem:[%s1018] sm:$0xff]
    %v1020 = vld [vmem:[%s1018 + $0x8] sm:$0xff]
    %v1021 = vld [vmem:[%s1018 + $0x10] sm:$0xff]
    %v1022 = vld [vmem:[%s1018 + $0x18] sm:$0xff]
    %v1023 = vld [vmem:[%s1018 + $0x20] sm:$0xff]
    %v1024 = vld [vmem:[%s1018 + $0x28] sm:$0xff]
    %v1025 = vld [vmem:[%s1018 + $0x30] sm:$0xff]
    %v1026 = vld [vmem:[%s1018 + $0x38] sm:$0xff]
    %v1027 = vlaneseq
    %v1028 = vshrl.u32 %v1027, 7
    %v1029 = vsub.s32 6, %v1028
    %v1030 = vrot.slane %v70, %v1029
    %1033 = vrot.lane.b32.xlu0 %v1014, 32
    %v1034 = vpop.permute.xlu0 %1033
    %1035 = vrot.lane.b32.xlu0 %v1017, 32
    %v1036 = vpop.permute.xlu0 %1035
    %v1037 = vsel %vm85, %v1034, 0
    %v1039 = vsel %vm85, %v1036, 0
    %1041 = vmatprep.subr.mxu0 0.0
    %1042 = vmatpush1.msra.mxu0 %v1019
    %1043 = vmatprep.subr.mxu0 0.0
    %1044 = vmatpush1.msra.mxu0 %v1020
    %1045 = vmatprep.subr.mxu0 0.0
    %1046 = vmatpush1.msra.mxu0 %v1021
    %1047 = vmatprep.subr.mxu0 0.0
    %1048 = vmatpush1.msra.mxu0 %v1022
    %1049 = vmatprep.subr.mxu0 0.0
    %1050 = vmatpush1.msra.mxu0 0.0
    %1051 = vmatprep.subr.mxu0 0.0
    %1052 = vmatpush1.msra.mxu0 0.0
    %1053 = vmatprep.subr.mxu0 0.0
    %1054 = vmatpush1.msra.mxu0 0.0
    %1055 = vmatprep.subr.mxu0 0.0
    %1056 = vmatpush1.msra.mxu0 0.0
    %1057 = vmatprep.subr.mxu0 0.0
    %1058 = vmatpush1.msra.mxu0 0.0
    %1059 = vmatprep.subr.mxu0 0.0
    %1060 = vmatpush1.msra.mxu0 0.0
    %1061 = vmatprep.subr.mxu0 0.0
    %1062 = vmatpush1.msra.mxu0 0.0
    %1063 = vmatprep.subr.mxu0 0.0
    %1064 = vmatpush1.msra.mxu0 0.0
    %1065 = vmatprep.subr.mxu0 0.0
    %1066 = vmatpush1.msra.mxu0 0.0
    %1067 = vmatprep.subr.mxu0 0.0
    %1068 = vmatpush1.msra.mxu0 0.0
    %1069 = vmatprep.subr.mxu0 0.0
    %1070 = vmatpush1.msra.mxu0 0.0
    %1071 = vmatprep.subr.mxu0 0.0
    %1072 = vmatpush1.msra.mxu0 0.0
    %1073 = vmatprep.subr.mxu0 0.0
    %1074 = vmatpush1.msra.mxu0 0.0
    %1075 = vmatprep.subr.mxu0 0.0
    %1076 = vmatpush1.msra.mxu0 0.0
    %1077 = vmatprep.subr.mxu0 0.0
    %1078 = vmatpush1.msra.mxu0 0.0
    %1079 = vmatprep.subr.mxu0 0.0
    %1080 = vmatpush1.msra.mxu0 0.0
    %1081 = vmatprep.subr.mxu0 0.0
    %1082 = vmatpush1.msra.mxu0 0.0
    %1083 = vmatprep.subr.mxu0 0.0
    %1084 = vmatpush1.msra.mxu0 0.0
    %1085 = vmatprep.subr.mxu0 0.0
    %1086 = vmatpush1.msra.mxu0 0.0
    %1087 = vmatprep.subr.mxu0 0.0
    %1088 = vmatpush1.msra.mxu0 0.0
    %1089 = vmatprep.subr.mxu0 0.0
    %1090 = vmatpush1.msra.mxu0 0.0
    %1091 = vmatprep.subr.mxu0 0.0
    %1092 = vmatpush1.msra.mxu0 0.0
    %1093 = vmatprep.subr.mxu0 0.0
    %1094 = vmatpush1.msra.mxu0 0.0
    %1095 = vmatprep.subr.mxu0 0.0
    %1096 = vmatpush1.msra.mxu0 0.0
    %1097 = vmatprep.subr.mxu0 0.0
    %1098 = vmatpush1.msra.mxu0 0.0
    %1099 = vmatprep.subr.mxu0 0.0
    %1100 = vmatpush1.msra.mxu0 0.0
    %1101 = vmatprep.subr.mxu0 0.0
    %1102 = vmatpush1.msra.mxu0 0.0
    %1103 = vmatprep.subr.mxu0 0.0
    %1104 = vmatpush1.msra.mxu0 0.0
    %1105 = vmatprep.mubr.f32.mxu0 0.0
    %1106 = vmatmul.mubr.f32.gmra.mrb[0].mxu0 %v1037
    %v1107 = vpop.f32.mrb[0].mxu0
    %v1108 = vadd.f32 %v1030, %v1107
    %v1109 = vpop.f32.mrb[0].mxu0
    %1110 = vmatprep.mubr.f32.mxu0 0.0
    %1111 = vmatmul.mubr.f32.gmra.mrb[0].mxu0 %v1039
    %v1112 = vpop.f32.mrb[0].mxu0
    %v1113 = vadd.f32 %v1030, %v1112
    %v1114 = vpop.f32.mrb[0].mxu0
    %1115 = vdwg.mxu0
    %1116 = vmatprep.subr.mxu0 0.0
    %1117 = vmatpush1.msra.mxu0 %v1023
    %1118 = vmatprep.subr.mxu0 0.0
    %1119 = vmatpush1.msra.mxu0 %v1024
    %1120 = vmatprep.subr.mxu0 0.0
    %1121 = vmatpush1.msra.mxu0 %v1025
    %1122 = vmatprep.subr.mxu0 0.0
    %1123 = vmatpush1.msra.mxu0 %v1026
    %1124 = vmatprep.subr.mxu0 0.0
    %1125 = vmatpush1.msra.mxu0 0.0
    %1126 = vmatprep.subr.mxu0 0.0
    %1127 = vmatpush1.msra.mxu0 0.0
    %1128 = vmatprep.subr.mxu0 0.0
    %1129 = vmatpush1.msra.mxu0 0.0
    %1130 = vmatprep.subr.mxu0 0.0
    %1131 = vmatpush1.msra.mxu0 0.0
    %1132 = vmatprep.subr.mxu0 0.0
    %1133 = vmatpush1.msra.mxu0 0.0
    %1134 = vmatprep.subr.mxu0 0.0
    %1135 = vmatpush1.msra.mxu0 0.0
    %1136 = vmatprep.subr.mxu0 0.0
    %1137 = vmatpush1.msra.mxu0 0.0
    %1138 = vmatprep.subr.mxu0 0.0
    %1139 = vmatpush1.msra.mxu0 0.0
    %1140 = vmatprep.subr.mxu0 0.0
    %1141 = vmatpush1.msra.mxu0 0.0
    %1142 = vmatprep.subr.mxu0 0.0
    %1143 = vmatpush1.msra.mxu0 0.0
    %1144 = vmatprep.subr.mxu0 0.0
    %1145 = vmatpush1.msra.mxu0 0.0
    %1146 = vmatprep.subr.mxu0 0.0
    %1147 = vmatpush1.msra.mxu0 0.0
    %1148 = vmatprep.subr.mxu0 0.0
    %1149 = vmatpush1.msra.mxu0 0.0
    %1150 = vmatprep.subr.mxu0 0.0
    %1151 = vmatpush1.msra.mxu0 0.0
    %1152 = vmatprep.subr.mxu0 0.0
    %1153 = vmatpush1.msra.mxu0 0.0
    %1154 = vmatprep.subr.mxu0 0.0
    %1155 = vmatpush1.msra.mxu0 0.0
    %1156 = vmatprep.subr.mxu0 0.0
    %1157 = vmatpush1.msra.mxu0 0.0
    %1158 = vmatprep.subr.mxu0 0.0
    %1159 = vmatpush1.msra.mxu0 0.0
    %1160 = vmatprep.subr.mxu0 0.0
    %1161 = vmatpush1.msra.mxu0 0.0
    %1162 = vmatprep.subr.mxu0 0.0
    %1163 = vmatpush1.msra.mxu0 0.0
    %1164 = vmatprep.subr.mxu0 0.0
    %1165 = vmatpush1.msra.mxu0 0.0
    %1166 = vmatprep.subr.mxu0 0.0
    %1167 = vmatpush1.msra.mxu0 0.0
    %1168 = vmatprep.subr.mxu0 0.0
    %1169 = vmatpush1.msra.mxu0 0.0
    %1170 = vmatprep.subr.mxu0 0.0
    %1171 = vmatpush1.msra.mxu0 0.0
    %1172 = vmatprep.subr.mxu0 0.0
    %1173 = vmatpush1.msra.mxu0 0.0
    %1174 = vmatprep.subr.mxu0 0.0
    %1175 = vmatpush1.msra.mxu0 0.0
    %1176 = vmatprep.subr.mxu0 0.0
    %1177 = vmatpush1.msra.mxu0 0.0
    %1178 = vmatprep.subr.mxu0 0.0
    %1179 = vmatpush1.msra.mxu0 0.0
    %1180 = vmatprep.mubr.f32.mxu0 0.0
    %1181 = vmatmul.mubr.f32.gmra.mrb[0].mxu0 %v168
    %v1182 = vpop.f32.mrb[0].mxu0
    %v1183 = vadd.f32 0.0, %v1182
    %v1184 = vpop.f32.mrb[0].mxu0
    %1185 = vdwg.mxu0
    %v1186 = vadd.f32 %v1108, %v1183
    %v1187 = vxor.u32 %v1186, 2147483648
    %v1188 = vmul.f32 %v1187, 1.442695
    %v1189 = vpow.pop %v1188
    %v1190 = vadd.f32 %v1189, 1.0
    %v1191 = vrcp.pop %v1190
    %v1192 = vmul.f32 1.0, %v1191
    %v1193 = vtanh.pop %v1186
    %v1194 = vmul.f32 %v1192, 0.0
    %1196 = vrot.lane.b32.xlu0 %v1193, 64
    %v1197 = vpop.permute.xlu0 %1196
    %v1199 = vmul.f32 %v1192, %v1197
    %1201 = vrot.lane.b32.xlu0 %v1199, 32
    %v1202 = vpop.permute.xlu0 %1201
    %v1204 = vadd.f32 %v1194, %v1202
    %v1205 = vtanh.pop %v1204
    %1207 = vrot.lane.b32.xlu0 %v1205, 64
    %v1208 = vpop.permute.xlu0 %1207
    %v1210 = vmul.f32 %v1192, %v1208
    %1212 = vrot.lane.b32.xlu0 %v1210, 32
    %v1213 = vpop.permute.xlu0 %1212
    %v1214 = vsel %vm85, %v1213, 0
    %1216 = vmatprep.subr.mxu0 0.0
    %1217 = vmatpush1.msra.mxu0 %v1023
    %1218 = vmatprep.subr.mxu0 0.0
    %1219 = vmatpush1.msra.mxu0 %v1024
    %1220 = vmatprep.subr.mxu0 0.0
    %1221 = vmatpush1.msra.mxu0 %v1025
    %1222 = vmatprep.subr.mxu0 0.0
    %1223 = vmatpush1.msra.mxu0 %v1026
    %1224 = vmatprep.subr.mxu0 0.0
    %1225 = vmatpush1.msra.mxu0 0.0
    %1226 = vmatprep.subr.mxu0 0.0
    %1227 = vmatpush1.msra.mxu0 0.0
    %1228 = vmatprep.subr.mxu0 0.0
    %1229 = vmatpush1.msra.mxu0 0.0
    %1230 = vmatprep.subr.mxu0 0.0
    %1231 = vmatpush1.msra.mxu0 0.0
    %1232 = vmatprep.subr.mxu0 0.0
    %1233 = vmatpush1.msra.mxu0 0.0
    %1234 = vmatprep.subr.mxu0 0.0
    %1235 = vmatpush1.msra.mxu0 0.0
    %1236 = vmatprep.subr.mxu0 0.0
    %1237 = vmatpush1.msra.mxu0 0.0
    %1238 = vmatprep.subr.mxu0 0.0
    %1239 = vmatpush1.msra.mxu0 0.0
    %1240 = vmatprep.subr.mxu0 0.0
    %1241 = vmatpush1.msra.mxu0 0.0
    %1242 = vmatprep.subr.mxu0 0.0
    %1243 = vmatpush1.msra.mxu0 0.0
    %1244 = vmatprep.subr.mxu0 0.0
    %1245 = vmatpush1.msra.mxu0 0.0
    %1246 = vmatprep.subr.mxu0 0.0
    %1247 = vmatpush1.msra.mxu0 0.0
    %1248 = vmatprep.subr.mxu0 0.0
    %1249 = vmatpush1.msra.mxu0 0.0
    %1250 = vmatprep.subr.mxu0 0.0
    %1251 = vmatpush1.msra.mxu0 0.0
    %1252 = vmatprep.subr.mxu0 0.0
    %1253 = vmatpush1.msra.mxu0 0.0
    %1254 = vmatprep.subr.mxu0 0.0
    %1255 = vmatpush1.msra.mxu0 0.0
    %1256 = vmatprep.subr.mxu0 0.0
    %1257 = vmatpush1.msra.mxu0 0.0
    %1258 = vmatprep.subr.mxu0 0.0
    %1259 = vmatpush1.msra.mxu0 0.0
    %1260 = vmatprep.subr.mxu0 0.0
    %1261 = vmatpush1.msra.mxu0 0.0
    %1262 = vmatprep.subr.mxu0 0.0
    %1263 = vmatpush1.msra.mxu0 0.0
    %1264 = vmatprep.subr.mxu0 0.0
    %1265 = vmatpush1.msra.mxu0 0.0
    %1266 = vmatprep.subr.mxu0 0.0
    %1267 = vmatpush1.msra.mxu0 0.0
    %1268 = vmatprep.subr.mxu0 0.0
    %1269 = vmatpush1.msra.mxu0 0.0
    %1270 = vmatprep.subr.mxu0 0.0
    %1271 = vmatpush1.msra.mxu0 0.0
    %1272 = vmatprep.subr.mxu0 0.0
    %1273 = vmatpush1.msra.mxu0 0.0
    %1274 = vmatprep.subr.mxu0 0.0
    %1275 = vmatpush1.msra.mxu0 0.0
    %1276 = vmatprep.subr.mxu0 0.0
    %1277 = vmatpush1.msra.mxu0 0.0
    %1278 = vmatprep.subr.mxu0 0.0
    %1279 = vmatpush1.msra.mxu0 0.0
    %1280 = vmatprep.mubr.f32.mxu0 0.0
    %1281 = vmatmul.mubr.f32.gmra.mrb[0].mxu0 %v1214
    %v1282 = vpop.f32.mrb[0].mxu0
    %v1283 = vadd.f32 0.0, %v1282
    %v1284 = vpop.f32.mrb[0].mxu0
    %1285 = vdwg.mxu0
    %v1287 = vrot.slane %v1283, 6
    %v1289 = vadd.f32 %v1108, %v1287
    %v1290 = vxor.u32 %v1289, 2147483648
    %v1291 = vmul.f32 %v1290, 1.442695
    %v1292 = vpow.pop %v1291
    %v1293 = vadd.f32 %v1292, 1.0
    %v1294 = vrcp.pop %v1293
    %v1295 = vmul.f32 1.0, %v1294
    %v1296 = vtanh.pop %v1289
    %v1298 = vrot.slane %v1204, 6
    %v1300 = vmul.f32 %v1295, %v1298
    %1302 = vrot.lane.b32.xlu0 %v1296, 64
    %v1303 = vpop.permute.xlu0 %1302
    %v1305 = vmul.f32 %v1295, %v1303
    %1307 = vrot.lane.b32.xlu0 %v1305, 32
    %v1308 = vpop.permute.xlu0 %1307
    %v1310 = vadd.f32 %v1300, %v1308
    %v1311 = vtanh.pop %v1310
    %1313 = vrot.lane.b32.xlu0 %v1311, 64
    %v1314 = vpop.permute.xlu0 %1313
    %v1316 = vmul.f32 %v1295, %v1314
    %v1318 = vrot.slane %v1316, 2
    %1319 = vrot.lane.b32.xlu0 %v1318, 32
    %v1320 = vpop.permute.xlu0 %1319
    %v1321 = vsel %vm85, %v1320, 0
    %1323 = vmatprep.subr.mxu0 0.0
    %1324 = vmatpush1.msra.mxu0 %v1023
    %1325 = vmatprep.subr.mxu0 0.0
    %1326 = vmatpush1.msra.mxu0 %v1024
    %1327 = vmatprep.subr.mxu0 0.0
    %1328 = vmatpush1.msra.mxu0 %v1025
    %1329 = vmatprep.subr.mxu0 0.0
    %1330 = vmatpush1.msra.mxu0 %v1026
    %1331 = vmatprep.subr.mxu0 0.0
    %1332 = vmatpush1.msra.mxu0 0.0
    %1333 = vmatprep.subr.mxu0 0.0
    %1334 = vmatpush1.msra.mxu0 0.0
    %1335 = vmatprep.subr.mxu0 0.0
    %1336 = vmatpush1.msra.mxu0 0.0
    %1337 = vmatprep.subr.mxu0 0.0
    %1338 = vmatpush1.msra.mxu0 0.0
    %1339 = vmatprep.subr.mxu0 0.0
    %1340 = vmatpush1.msra.mxu0 0.0
    %1341 = vmatprep.subr.mxu0 0.0
    %1342 = vmatpush1.msra.mxu0 0.0
    %1343 = vmatprep.subr.mxu0 0.0
    %1344 = vmatpush1.msra.mxu0 0.0
    %1345 = vmatprep.subr.mxu0 0.0
    %1346 = vmatpush1.msra.mxu0 0.0
    %1347 = vmatprep.subr.mxu0 0.0
    %1348 = vmatpush1.msra.mxu0 0.0
    %1349 = vmatprep.subr.mxu0 0.0
    %1350 = vmatpush1.msra.mxu0 0.0
    %1351 = vmatprep.subr.mxu0 0.0
    %1352 = vmatpush1.msra.mxu0 0.0
    %1353 = vmatprep.subr.mxu0 0.0
    %1354 = vmatpush1.msra.mxu0 0.0
    %1355 = vmatprep.subr.mxu0 0.0
    %1356 = vmatpush1.msra.mxu0 0.0
    %1357 = vmatprep.subr.mxu0 0.0
    %1358 = vmatpush1.msra.mxu0 0.0
    %1359 = vmatprep.subr.mxu0 0.0
    %1360 = vmatpush1.msra.mxu0 0.0
    %1361 = vmatprep.subr.mxu0 0.0
    %1362 = vmatpush1.msra.mxu0 0.0
    %1363 = vmatprep.subr.mxu0 0.0
    %1364 = vmatpush1.msra.mxu0 0.0
    %1365 = vmatprep.subr.mxu0 0.0
    %1366 = vmatpush1.msra.mxu0 0.0
    %1367 = vmatprep.subr.mxu0 0.0
    %1368 = vmatpush1.msra.mxu0 0.0
    %1369 = vmatprep.subr.mxu0 0.0
    %1370 = vmatpush1.msra.mxu0 0.0
    %1371 = vmatprep.subr.mxu0 0.0
    %1372 = vmatpush1.msra.mxu0 0.0
    %1373 = vmatprep.subr.mxu0 0.0
    %1374 = vmatpush1.msra.mxu0 0.0
    %1375 = vmatprep.subr.mxu0 0.0
    %1376 = vmatpush1.msra.mxu0 0.0
    %1377 = vmatprep.subr.mxu0 0.0
    %1378 = vmatpush1.msra.mxu0 0.0
    %1379 = vmatprep.subr.mxu0 0.0
    %1380 = vmatpush1.msra.mxu0 0.0
    %1381 = vmatprep.subr.mxu0 0.0
    %1382 = vmatpush1.msra.mxu0 0.0
    %1383 = vmatprep.subr.mxu0 0.0
    %1384 = vmatpush1.msra.mxu0 0.0
    %1385 = vmatprep.subr.mxu0 0.0
    %1386 = vmatpush1.msra.mxu0 0.0
    %1387 = vmatprep.mubr.f32.mxu0 0.0
    %1388 = vmatmul.mubr.f32.gmra.mrb[0].mxu0 %v1321
    %v1389 = vpop.f32.mrb[0].mxu0
    %v1390 = vadd.f32 0.0, %v1389
    %v1391 = vpop.f32.mrb[0].mxu0
    %1392 = vdwg.mxu0
    %v1394 = vrot.slane %v1390, 4
    %v1396 = vadd.f32 %v1108, %v1394
    %v1397 = vxor.u32 %v1396, 2147483648
    %v1398 = vmul.f32 %v1397, 1.442695
    %v1399 = vpow.pop %v1398
    %v1400 = vadd.f32 %v1399, 1.0
    %v1401 = vrcp.pop %v1400
    %v1402 = vmul.f32 1.0, %v1401
    %v1403 = vtanh.pop %v1396
    %v1405 = vrot.slane %v1310, 6
    %v1407 = vmul.f32 %v1402, %v1405
    %1409 = vrot.lane.b32.xlu0 %v1403, 64
    %v1410 = vpop.permute.xlu0 %1409
    %v1412 = vmul.f32 %v1402, %v1410
    %1414 = vrot.lane.b32.xlu0 %v1412, 32
    %v1415 = vpop.permute.xlu0 %1414
    %v1417 = vadd.f32 %v1407, %v1415
    %v1418 = vtanh.pop %v1417
    %1420 = vrot.lane.b32.xlu0 %v1418, 64
    %v1421 = vpop.permute.xlu0 %1420
    %v1423 = vmul.f32 %v1402, %v1421
    %v1425 = vrot.slane %v1423, 4
    %1426 = vrot.lane.b32.xlu0 %v1425, 32
    %v1427 = vpop.permute.xlu0 %1426
    %v1428 = vsel %vm85, %v1427, 0
    %1430 = vmatprep.subr.mxu0 0.0
    %1431 = vmatpush1.msra.mxu0 %v1023
    %1432 = vmatprep.subr.mxu0 0.0
    %1433 = vmatpush1.msra.mxu0 %v1024
    %1434 = vmatprep.subr.mxu0 0.0
    %1435 = vmatpush1.msra.mxu0 %v1025
    %1436 = vmatprep.subr.mxu0 0.0
    %1437 = vmatpush1.msra.mxu0 %v1026
    %1438 = vmatprep.subr.mxu0 0.0
    %1439 = vmatpush1.msra.mxu0 0.0
    %1440 = vmatprep.subr.mxu0 0.0
    %1441 = vmatpush1.msra.mxu0 0.0
    %1442 = vmatprep.subr.mxu0 0.0
    %1443 = vmatpush1.msra.mxu0 0.0
    %1444 = vmatprep.subr.mxu0 0.0
    %1445 = vmatpush1.msra.mxu0 0.0
    %1446 = vmatprep.subr.mxu0 0.0
    %1447 = vmatpush1.msra.mxu0 0.0
    %1448 = vmatprep.subr.mxu0 0.0
    %1449 = vmatpush1.msra.mxu0 0.0
    %1450 = vmatprep.subr.mxu0 0.0
    %1451 = vmatpush1.msra.mxu0 0.0
    %1452 = vmatprep.subr.mxu0 0.0
    %1453 = vmatpush1.msra.mxu0 0.0
    %1454 = vmatprep.subr.mxu0 0.0
    %1455 = vmatpush1.msra.mxu0 0.0
    %1456 = vmatprep.subr.mxu0 0.0
    %1457 = vmatpush1.msra.mxu0 0.0
    %1458 = vmatprep.subr.mxu0 0.0
    %1459 = vmatpush1.msra.mxu0 0.0
    %1460 = vmatprep.subr.mxu0 0.0
    %1461 = vmatpush1.msra.mxu0 0.0
    %1462 = vmatprep.subr.mxu0 0.0
    %1463 = vmatpush1.msra.mxu0 0.0
    %1464 = vmatprep.subr.mxu0 0.0
    %1465 = vmatpush1.msra.mxu0 0.0
    %1466 = vmatprep.subr.mxu0 0.0
    %1467 = vmatpush1.msra.mxu0 0.0
    %1468 = vmatprep.subr.mxu0 0.0
    %1469 = vmatpush1.msra.mxu0 0.0
    %1470 = vmatprep.subr.mxu0 0.0
    %1471 = vmatpush1.msra.mxu0 0.0
    %1472 = vmatprep.subr.mxu0 0.0
    %1473 = vmatpush1.msra.mxu0 0.0
    %1474 = vmatprep.subr.mxu0 0.0
    %1475 = vmatpush1.msra.mxu0 0.0
    %1476 = vmatprep.subr.mxu0 0.0
    %1477 = vmatpush1.msra.mxu0 0.0
    %1478 = vmatprep.subr.mxu0 0.0
    %1479 = vmatpush1.msra.mxu0 0.0
    %1480 = vmatprep.subr.mxu0 0.0
    %1481 = vmatpush1.msra.mxu0 0.0
    %1482 = vmatprep.subr.mxu0 0.0
    %1483 = vmatpush1.msra.mxu0 0.0
    %1484 = vmatprep.subr.mxu0 0.0
    %1485 = vmatpush1.msra.mxu0 0.0
    %1486 = vmatprep.subr.mxu0 0.0
    %1487 = vmatpush1.msra.mxu0 0.0
    %1488 = vmatprep.subr.mxu0 0.0
    %1489 = vmatpush1.msra.mxu0 0.0
    %1490 = vmatprep.subr.mxu0 0.0
    %1491 = vmatpush1.msra.mxu0 0.0
    %1492 = vmatprep.subr.mxu0 0.0
    %1493 = vmatpush1.msra.mxu0 0.0
    %1494 = vmatprep.mubr.f32.mxu0 0.0
    %1495 = vmatmul.mubr.f32.gmra.mrb[0].mxu0 %v1428
    %v1496 = vpop.f32.mrb[0].mxu0
    %v1497 = vadd.f32 0.0, %v1496
    %v1498 = vpop.f32.mrb[0].mxu0
    %1499 = vdwg.mxu0
    %v1501 = vrot.slane %v1497, 2
    %v1503 = vadd.f32 %v1108, %v1501
    %v1504 = vxor.u32 %v1503, 2147483648
    %v1505 = vmul.f32 %v1504, 1.442695
    %v1506 = vpow.pop %v1505
    %v1507 = vadd.f32 %v1506, 1.0
    %v1508 = vrcp.pop %v1507
    %v1509 = vmul.f32 1.0, %v1508
    %v1510 = vtanh.pop %v1503
    %v1512 = vrot.slane %v1417, 6
    %v1514 = vmul.f32 %v1509, %v1512
    %1516 = vrot.lane.b32.xlu0 %v1510, 64
    %v1517 = vpop.permute.xlu0 %1516
    %v1519 = vmul.f32 %v1509, %v1517
    %1521 = vrot.lane.b32.xlu0 %v1519, 32
    %v1522 = vpop.permute.xlu0 %1521
    %v1524 = vadd.f32 %v1514, %v1522
    %v1525 = vtanh.pop %v1524
    %1527 = vrot.lane.b32.xlu0 %v1525, 64
    %v1528 = vpop.permute.xlu0 %1527
    %v1530 = vmul.f32 %v1509, %v1528
    %v1532 = vrot.slane %v1530, 6
    %1533 = vrot.lane.b32.xlu0 %v1532, 32
    %v1534 = vpop.permute.xlu0 %1533
    %v1535 = vsel %vm85, %v1534, 0
    %1537 = vmatprep.subr.mxu0 0.0
    %1538 = vmatpush1.msra.mxu0 %v1023
    %1539 = vmatprep.subr.mxu0 0.0
    %1540 = vmatpush1.msra.mxu0 %v1024
    %1541 = vmatprep.subr.mxu0 0.0
    %1542 = vmatpush1.msra.mxu0 %v1025
    %1543 = vmatprep.subr.mxu0 0.0
    %1544 = vmatpush1.msra.mxu0 %v1026
    %1545 = vmatprep.subr.mxu0 0.0
    %1546 = vmatpush1.msra.mxu0 0.0
    %1547 = vmatprep.subr.mxu0 0.0
    %1548 = vmatpush1.msra.mxu0 0.0
    %1549 = vmatprep.subr.mxu0 0.0
    %1550 = vmatpush1.msra.mxu0 0.0
    %1551 = vmatprep.subr.mxu0 0.0
    %1552 = vmatpush1.msra.mxu0 0.0
    %1553 = vmatprep.subr.mxu0 0.0
    %1554 = vmatpush1.msra.mxu0 0.0
    %1555 = vmatprep.subr.mxu0 0.0
    %1556 = vmatpush1.msra.mxu0 0.0
    %1557 = vmatprep.subr.mxu0 0.0
    %1558 = vmatpush1.msra.mxu0 0.0
    %1559 = vmatprep.subr.mxu0 0.0
    %1560 = vmatpush1.msra.mxu0 0.0
    %1561 = vmatprep.subr.mxu0 0.0
    %1562 = vmatpush1.msra.mxu0 0.0
    %1563 = vmatprep.subr.mxu0 0.0
    %1564 = vmatpush1.msra.mxu0 0.0
    %1565 = vmatprep.subr.mxu0 0.0
    %1566 = vmatpush1.msra.mxu0 0.0
    %1567 = vmatprep.subr.mxu0 0.0
    %1568 = vmatpush1.msra.mxu0 0.0
    %1569 = vmatprep.subr.mxu0 0.0
    %1570 = vmatpush1.msra.mxu0 0.0
    %1571 = vmatprep.subr.mxu0 0.0
    %1572 = vmatpush1.msra.mxu0 0.0
    %1573 = vmatprep.subr.mxu0 0.0
    %1574 = vmatpush1.msra.mxu0 0.0
    %1575 = vmatprep.subr.mxu0 0.0
    %1576 = vmatpush1.msra.mxu0 0.0
    %1577 = vmatprep.subr.mxu0 0.0
    %1578 = vmatpush1.msra.mxu0 0.0
    %1579 = vmatprep.subr.mxu0 0.0
    %1580 = vmatpush1.msra.mxu0 0.0
    %1581 = vmatprep.subr.mxu0 0.0
    %1582 = vmatpush1.msra.mxu0 0.0
    %1583 = vmatprep.subr.mxu0 0.0
    %1584 = vmatpush1.msra.mxu0 0.0
    %1585 = vmatprep.subr.mxu0 0.0
    %1586 = vmatpush1.msra.mxu0 0.0
    %1587 = vmatprep.subr.mxu0 0.0
    %1588 = vmatpush1.msra.mxu0 0.0
    %1589 = vmatprep.subr.mxu0 0.0
    %1590 = vmatpush1.msra.mxu0 0.0
    %1591 = vmatprep.subr.mxu0 0.0
    %1592 = vmatpush1.msra.mxu0 0.0
    %1593 = vmatprep.subr.mxu0 0.0
    %1594 = vmatpush1.msra.mxu0 0.0
    %1595 = vmatprep.subr.mxu0 0.0
    %1596 = vmatpush1.msra.mxu0 0.0
    %1597 = vmatprep.subr.mxu0 0.0
    %1598 = vmatpush1.msra.mxu0 0.0
    %1599 = vmatprep.subr.mxu0 0.0
    %1600 = vmatpush1.msra.mxu0 0.0
    %1601 = vmatprep.mubr.f32.mxu0 0.0
    %1602 = vmatmul.mubr.f32.gmra.mrb[0].mxu0 %v1535
    %v1603 = vpop.f32.mrb[0].mxu0
    %v1604 = vadd.f32 0.0, %v1603
    %v1605 = vpop.f32.mrb[0].mxu0
    %1606 = vdwg.mxu0
    %v1607 = vadd.f32 %v1113, %v1604
    %v1608 = vxor.u32 %v1607, 2147483648
    %v1609 = vmul.f32 %v1608, 1.442695
    %v1610 = vpow.pop %v1609
    %v1611 = vadd.f32 %v1610, 1.0
    %v1612 = vrcp.pop %v1611
    %v1613 = vmul.f32 1.0, %v1612
    %v1614 = vtanh.pop %v1607
    %v1616 = vrot.slane %v1524, 6
    %v1618 = vmul.f32 %v1613, %v1616
    %1620 = vrot.lane.b32.xlu0 %v1614, 64
    %v1621 = vpop.permute.xlu0 %1620
    %v1623 = vmul.f32 %v1613, %v1621
    %1625 = vrot.lane.b32.xlu0 %v1623, 32
    %v1626 = vpop.permute.xlu0 %1625
    %v1628 = vadd.f32 %v1618, %v1626
    %v1629 = vtanh.pop %v1628
    %1631 = vrot.lane.b32.xlu0 %v1629, 64
    %v1632 = vpop.permute.xlu0 %1631
    %v1634 = vmul.f32 %v1613, %v1632
    %1636 = vrot.lane.b32.xlu0 %v1634, 32
    %v1637 = vpop.permute.xlu0 %1636
    %v1638 = vsel %vm85, %v1637, 0
    %1640 = vmatprep.subr.mxu0 0.0
    %1641 = vmatpush1.msra.mxu0 %v1023
    %1642 = vmatprep.subr.mxu0 0.0
    %1643 = vmatpush1.msra.mxu0 %v1024
    %1644 = vmatprep.subr.mxu0 0.0
    %1645 = vmatpush1.msra.mxu0 %v1025
    %1646 = vmatprep.subr.mxu0 0.0
    %1647 = vmatpush1.msra.mxu0 %v1026
    %1648 = vmatprep.subr.mxu0 0.0
    %1649 = vmatpush1.msra.mxu0 0.0
    %1650 = vmatprep.subr.mxu0 0.0
    %1651 = vmatpush1.msra.mxu0 0.0
    %1652 = vmatprep.subr.mxu0 0.0
    %1653 = vmatpush1.msra.mxu0 0.0
    %1654 = vmatprep.subr.mxu0 0.0
    %1655 = vmatpush1.msra.mxu0 0.0
    %1656 = vmatprep.subr.mxu0 0.0
    %1657 = vmatpush1.msra.mxu0 0.0
    %1658 = vmatprep.subr.mxu0 0.0
    %1659 = vmatpush1.msra.mxu0 0.0
    %1660 = vmatprep.subr.mxu0 0.0
    %1661 = vmatpush1.msra.mxu0 0.0
    %1662 = vmatprep.subr.mxu0 0.0
    %1663 = vmatpush1.msra.mxu0 0.0
    %1664 = vmatprep.subr.mxu0 0.0
    %1665 = vmatpush1.msra.mxu0 0.0
    %1666 = vmatprep.subr.mxu0 0.0
    %1667 = vmatpush1.msra.mxu0 0.0
    %1668 = vmatprep.subr.mxu0 0.0
    %1669 = vmatpush1.msra.mxu0 0.0
    %1670 = vmatprep.subr.mxu0 0.0
    %1671 = vmatpush1.msra.mxu0 0.0
    %1672 = vmatprep.subr.mxu0 0.0
    %1673 = vmatpush1.msra.mxu0 0.0
    %1674 = vmatprep.subr.mxu0 0.0
    %1675 = vmatpush1.msra.mxu0 0.0
    %1676 = vmatprep.subr.mxu0 0.0
    %1677 = vmatpush1.msra.mxu0 0.0
    %1678 = vmatprep.subr.mxu0 0.0
    %1679 = vmatpush1.msra.mxu0 0.0
    %1680 = vmatprep.subr.mxu0 0.0
    %1681 = vmatpush1.msra.mxu0 0.0
    %1682 = vmatprep.subr.mxu0 0.0
    %1683 = vmatpush1.msra.mxu0 0.0
    %1684 = vmatprep.subr.mxu0 0.0
    %1685 = vmatpush1.msra.mxu0 0.0
    %1686 = vmatprep.subr.mxu0 0.0
    %1687 = vmatpush1.msra.mxu0 0.0
    %1688 = vmatprep.subr.mxu0 0.0
    %1689 = vmatpush1.msra.mxu0 0.0
    %1690 = vmatprep.subr.mxu0 0.0
    %1691 = vmatpush1.msra.mxu0 0.0
    %1692 = vmatprep.subr.mxu0 0.0
    %1693 = vmatpush1.msra.mxu0 0.0
    %1694 = vmatprep.subr.mxu0 0.0
    %1695 = vmatpush1.msra.mxu0 0.0
    %1696 = vmatprep.subr.mxu0 0.0
    %1697 = vmatpush1.msra.mxu0 0.0
    %1698 = vmatprep.subr.mxu0 0.0
    %1699 = vmatpush1.msra.mxu0 0.0
    %1700 = vmatprep.subr.mxu0 0.0
    %1701 = vmatpush1.msra.mxu0 0.0
    %1702 = vmatprep.subr.mxu0 0.0
    %1703 = vmatpush1.msra.mxu0 0.0
    %1704 = vmatprep.mubr.f32.mxu0 0.0
    %1705 = vmatmul.mubr.f32.gmra.mrb[0].mxu0 %v1638
    %v1706 = vpop.f32.mrb[0].mxu0
    %v1707 = vadd.f32 0.0, %v1706
    %v1708 = vpop.f32.mrb[0].mxu0
    %1709 = vdwg.mxu0
    %v1711 = vrot.slane %v1707, 6
    %v1713 = vadd.f32 %v1113, %v1711
    %v1714 = vxor.u32 %v1713, 2147483648
    %v1715 = vmul.f32 %v1714, 1.442695
    %v1716 = vpow.pop %v1715
    %v1717 = vadd.f32 %v1716, 1.0
    %v1718 = vrcp.pop %v1717
    %v1719 = vmul.f32 1.0, %v1718
    %v1720 = vtanh.pop %v1713
    %v1722 = vrot.slane %v1628, 6
    %v1724 = vmul.f32 %v1719, %v1722
    %1726 = vrot.lane.b32.xlu0 %v1720, 64
    %v1727 = vpop.permute.xlu0 %1726
    %v1729 = vmul.f32 %v1719, %v1727
    %1731 = vrot.lane.b32.xlu0 %v1729, 32
    %v1732 = vpop.permute.xlu0 %1731
    %v1734 = vadd.f32 %v1724, %v1732
    %v1735 = vtanh.pop %v1734
    %1737 = vrot.lane.b32.xlu0 %v1735, 64
    %v1738 = vpop.permute.xlu0 %1737
    %v1740 = vmul.f32 %v1719, %v1738
    %v1742 = vrot.slane %v1740, 2
    %1743 = vrot.lane.b32.xlu0 %v1742, 32
    %v1744 = vpop.permute.xlu0 %1743
    %v1745 = vsel %vm85, %v1744, 0
    %1747 = vmatprep.subr.mxu0 0.0
    %1748 = vmatpush1.msra.mxu0 %v1023
    %1749 = vmatprep.subr.mxu0 0.0
    %1750 = vmatpush1.msra.mxu0 %v1024
    %1751 = vmatprep.subr.mxu0 0.0
    %1752 = vmatpush1.msra.mxu0 %v1025
    %1753 = vmatprep.subr.mxu0 0.0
    %1754 = vmatpush1.msra.mxu0 %v1026
    %1755 = vmatprep.subr.mxu0 0.0
    %1756 = vmatpush1.msra.mxu0 0.0
    %1757 = vmatprep.subr.mxu0 0.0
    %1758 = vmatpush1.msra.mxu0 0.0
    %1759 = vmatprep.subr.mxu0 0.0
    %1760 = vmatpush1.msra.mxu0 0.0
    %1761 = vmatprep.subr.mxu0 0.0
    %1762 = vmatpush1.msra.mxu0 0.0
    %1763 = vmatprep.subr.mxu0 0.0
    %1764 = vmatpush1.msra.mxu0 0.0
    %1765 = vmatprep.subr.mxu0 0.0
    %1766 = vmatpush1.msra.mxu0 0.0
    %1767 = vmatprep.subr.mxu0 0.0
    %1768 = vmatpush1.msra.mxu0 0.0
    %1769 = vmatprep.subr.mxu0 0.0
    %1770 = vmatpush1.msra.mxu0 0.0
    %1771 = vmatprep.subr.mxu0 0.0
    %1772 = vmatpush1.msra.mxu0 0.0
    %1773 = vmatprep.subr.mxu0 0.0
    %1774 = vmatpush1.msra.mxu0 0.0
    %1775 = vmatprep.subr.mxu0 0.0
    %1776 = vmatpush1.msra.mxu0 0.0
    %1777 = vmatprep.subr.mxu0 0.0
    %1778 = vmatpush1.msra.mxu0 0.0
    %1779 = vmatprep.subr.mxu0 0.0
    %1780 = vmatpush1.msra.mxu0 0.0
    %1781 = vmatprep.subr.mxu0 0.0
    %1782 = vmatpush1.msra.mxu0 0.0
    %1783 = vmatprep.subr.mxu0 0.0
    %1784 = vmatpush1.msra.mxu0 0.0
    %1785 = vmatprep.subr.mxu0 0.0
    %1786 = vmatpush1.msra.mxu0 0.0
    %1787 = vmatprep.subr.mxu0 0.0
    %1788 = vmatpush1.msra.mxu0 0.0
    %1789 = vmatprep.subr.mxu0 0.0
    %1790 = vmatpush1.msra.mxu0 0.0
    %1791 = vmatprep.subr.mxu0 0.0
    %1792 = vmatpush1.msra.mxu0 0.0
    %1793 = vmatprep.subr.mxu0 0.0
    %1794 = vmatpush1.msra.mxu0 0.0
    %1795 = vmatprep.subr.mxu0 0.0
    %1796 = vmatpush1.msra.mxu0 0.0
    %1797 = vmatprep.subr.mxu0 0.0
    %1798 = vmatpush1.msra.mxu0 0.0
    %1799 = vmatprep.subr.mxu0 0.0
    %1800 = vmatpush1.msra.mxu0 0.0
    %1801 = vmatprep.subr.mxu0 0.0
    %1802 = vmatpush1.msra.mxu0 0.0
    %1803 = vmatprep.subr.mxu0 0.0
    %1804 = vmatpush1.msra.mxu0 0.0
    %1805 = vmatprep.subr.mxu0 0.0
    %1806 = vmatpush1.msra.mxu0 0.0
    %1807 = vmatprep.subr.mxu0 0.0
    %1808 = vmatpush1.msra.mxu0 0.0
    %1809 = vmatprep.subr.mxu0 0.0
    %1810 = vmatpush1.msra.mxu0 0.0
    %1811 = vmatprep.mubr.f32.mxu0 0.0
    %1812 = vmatmul.mubr.f32.gmra.mrb[0].mxu0 %v1745
    %v1813 = vpop.f32.mrb[0].mxu0
    %v1814 = vadd.f32 0.0, %v1813
    %v1815 = vpop.f32.mrb[0].mxu0
    %1816 = vdwg.mxu0
    %v1818 = vrot.slane %v1814, 4
    %v1820 = vadd.f32 %v1113, %v1818
    %v1821 = vxor.u32 %v1820, 2147483648
    %v1822 = vmul.f32 %v1821, 1.442695
    %v1823 = vpow.pop %v1822
    %v1824 = vadd.f32 %v1823, 1.0
    %v1825 = vrcp.pop %v1824
    %v1826 = vmul.f32 1.0, %v1825
    %v1827 = vtanh.pop %v1820
    %v1829 = vrot.slane %v1734, 6
    %v1831 = vmul.f32 %v1826, %v1829
    %1833 = vrot.lane.b32.xlu0 %v1827, 64
    %v1834 = vpop.permute.xlu0 %1833
    %v1836 = vmul.f32 %v1826, %v1834
    %1838 = vrot.lane.b32.xlu0 %v1836, 32
    %v1839 = vpop.permute.xlu0 %1838
    %v1841 = vadd.f32 %v1831, %v1839
    %v1842 = vtanh.pop %v1841
    %1844 = vrot.lane.b32.xlu0 %v1842, 64
    %v1845 = vpop.permute.xlu0 %1844
    %v1847 = vmul.f32 %v1826, %v1845
    %v1849 = vrot.slane %v1847, 4
    %1850 = vrot.lane.b32.xlu0 %v1849, 32
    %v1851 = vpop.permute.xlu0 %1850
    %v1852 = vsel %vm85, %v1851, 0
    %1854 = vmatprep.subr.mxu0 0.0
    %1855 = vmatpush1.msra.mxu0 %v1023
    %1856 = vmatprep.subr.mxu0 0.0
    %1857 = vmatpush1.msra.mxu0 %v1024
    %1858 = vmatprep.subr.mxu0 0.0
    %1859 = vmatpush1.msra.mxu0 %v1025
    %1860 = vmatprep.subr.mxu0 0.0
    %1861 = vmatpush1.msra.mxu0 %v1026
    %1862 = vmatprep.subr.mxu0 0.0
    %1863 = vmatpush1.msra.mxu0 0.0
    %1864 = vmatprep.subr.mxu0 0.0
    %1865 = vmatpush1.msra.mxu0 0.0
    %1866 = vmatprep.subr.mxu0 0.0
    %1867 = vmatpush1.msra.mxu0 0.0
    %1868 = vmatprep.subr.mxu0 0.0
    %1869 = vmatpush1.msra.mxu0 0.0
    %1870 = vmatprep.subr.mxu0 0.0
    %1871 = vmatpush1.msra.mxu0 0.0
    %1872 = vmatprep.subr.mxu0 0.0
    %1873 = vmatpush1.msra.mxu0 0.0
    %1874 = vmatprep.subr.mxu0 0.0
    %1875 = vmatpush1.msra.mxu0 0.0
    %1876 = vmatprep.subr.mxu0 0.0
    %1877 = vmatpush1.msra.mxu0 0.0
    %1878 = vmatprep.subr.mxu0 0.0
    %1879 = vmatpush1.msra.mxu0 0.0
    %1880 = vmatprep.subr.mxu0 0.0
    %1881 = vmatpush1.msra.mxu0 0.0
    %1882 = vmatprep.subr.mxu0 0.0
    %1883 = vmatpush1.msra.mxu0 0.0
    %1884 = vmatprep.subr.mxu0 0.0
    %1885 = vmatpush1.msra.mxu0 0.0
    %1886 = vmatprep.subr.mxu0 0.0
    %1887 = vmatpush1.msra.mxu0 0.0
    %1888 = vmatprep.subr.mxu0 0.0
    %1889 = vmatpush1.msra.mxu0 0.0
    %1890 = vmatprep.subr.mxu0 0.0
    %1891 = vmatpush1.msra.mxu0 0.0
    %1892 = vmatprep.subr.mxu0 0.0
    %1893 = vmatpush1.msra.mxu0 0.0
    %1894 = vmatprep.subr.mxu0 0.0
    %1895 = vmatpush1.msra.mxu0 0.0
    %1896 = vmatprep.subr.mxu0 0.0
    %1897 = vmatpush1.msra.mxu0 0.0
    %1898 = vmatprep.subr.mxu0 0.0
    %1899 = vmatpush1.msra.mxu0 0.0
    %1900 = vmatprep.subr.mxu0 0.0
    %1901 = vmatpush1.msra.mxu0 0.0
    %1902 = vmatprep.subr.mxu0 0.0
    %1903 = vmatpush1.msra.mxu0 0.0
    %1904 = vmatprep.subr.mxu0 0.0
    %1905 = vmatpush1.msra.mxu0 0.0
    %1906 = vmatprep.subr.mxu0 0.0
    %1907 = vmatpush1.msra.mxu0 0.0
    %1908 = vmatprep.subr.mxu0 0.0
    %1909 = vmatpush1.msra.mxu0 0.0
    %1910 = vmatprep.subr.mxu0 0.0
    %1911 = vmatpush1.msra.mxu0 0.0
    %1912 = vmatprep.subr.mxu0 0.0
    %1913 = vmatpush1.msra.mxu0 0.0
    %1914 = vmatprep.subr.mxu0 0.0
    %1915 = vmatpush1.msra.mxu0 0.0
    %1916 = vmatprep.subr.mxu0 0.0
    %1917 = vmatpush1.msra.mxu0 0.0
    %1918 = vmatprep.mubr.f32.mxu0 0.0
    %1919 = vmatmul.mubr.f32.gmra.mrb[0].mxu0 %v1852
    %v1920 = vpop.f32.mrb[0].mxu0
    %v1921 = vadd.f32 0.0, %v1920
    %v1922 = vpop.f32.mrb[0].mxu0
    %1923 = vdwg.mxu0
    %v1925 = vrot.slane %v1921, 2
    %v1927 = vadd.f32 %v1113, %v1925
    %v1928 = vxor.u32 %v1927, 2147483648
    %v1929 = vmul.f32 %v1928, 1.442695
    %v1930 = vpow.pop %v1929
    %v1931 = vadd.f32 %v1930, 1.0
    %v1932 = vrcp.pop %v1931
    %v1933 = vmul.f32 1.0, %v1932
    %v1934 = vtanh.pop %v1927
    %v1936 = vrot.slane %v1841, 6
    %v1938 = vmul.f32 %v1933, %v1936
    %1940 = vrot.lane.b32.xlu0 %v1934, 64
    %v1941 = vpop.permute.xlu0 %1940
    %v1943 = vmul.f32 %v1933, %v1941
    %1945 = vrot.lane.b32.xlu0 %v1943, 32
    %v1946 = vpop.permute.xlu0 %1945
    %v1948 = vadd.f32 %v1938, %v1946
    %v1949 = vtanh.pop %v1948
    %1951 = vrot.lane.b32.xlu0 %v1949, 64
    %v1952 = vpop.permute.xlu0 %1951
    %v1954 = vmul.f32 %v1933, %v1952
    %s1955 = sld [smem:[#allocation9]]
    %s1956 = sld [smem:[#allocation9 + $0x1]]
    %s1957 = sld [smem:[#allocation9 + $0x2]]
    %s1958 = sld [smem:[#allocation9 + $0x3]]
    %v1959 = vlaneseq
    %v1960 = vshrl.u32 %v1959, 7
    %v1961 = vsub.s32 0, %v1960
    %v1962 = vrot.slane %v70, %v1961
    %1964 = vrot.lane.b32.xlu0 %v1962, 96
    %v1965 = vpop.permute.xlu0 %1964
    %v1967 = vmul.f32 %v1954, %v1965
    %1969 = vrot.lane.b32.xlu0 %v1967, 32
    %v1970 = vpop.permute.xlu0 %1969
    %vm1972 = vcmask 261126
    %v1973 = vsel %vm1972, %v1970, 0.0
    %1974 = vadd.xlane.f32.xlu0 %v1973
    %v1975 = vpop.xlane.xlu0 %1974
    %v1976 = vstv %s1955
    %v1977 = vadd.f32 %v1975, %v1976
    %v1978 = vstv %s1956
    %v1979 = vmul.f32 %v1978, %v1977
    %v1980 = vstv %s1957
    %v1981 = vadd.f32 %v1979, %v1980
    %v1982 = vmax.f32 %v1981, 0.0
    %v1983 = vmax.f32 %v70, 0.0
    %v1985 = vrot.slane %v70, 5
    %v1987 = vmul.f32 %v1982, %v1985
    %v1989 = vrot.slane %v1987, 6
    %vm1991 = vcmask 1024
    %v1992 = vsel %vm1991, %v1989, 0.0
    %v1993 = vrot.slane %v1992, 4
    %v1994 = vadd.f32 %v1992, %v1993
    %v1995 = vrot.slane %v1994, 2
    %v1996 = vadd.f32 %v1994, %v1995
    %v1997 = vrot.slane %v1996, 1
    %v1998 = vadd.f32 %v1996, %v1997
    %v1999 = vrot.slane %v70, 7
    %v2001 = vmul.f32 %v1983, %v1999
    %vm2002 = vcmask 1042434
    %v2003 = vsel %vm2002, %v2001, 0.0
    %2004 = vadd.xlane.f32.xlu0 %v2003
    %v2005 = vpop.xlane.xlu0 %2004
    %v2006 = vadd.f32 %v1998, %v2005
    %v2007 = vstv %s1958
    %v2008 = vadd.f32 %v2006, %v2007
    %vm2009 = vcmask 2050
    %2010 = vst.msk [vmem:[#allocation10 - $0x2] sm:$0x4] %vm2009, %v2008
    // Predicated region
    $region34: #{tpu_custom_call.1} parent=1 // pred_check
      _
    $region35: #{tpu_custom_call.1} parent=1 // pred_check_branch
      %2012 = sbr.rel (0) target = $region37
    $region36: #{tpu_custom_call.1} parent=1 // pred_region
      %s2014 = ssub.s32 16, 16
      %2015 = vsyncadd [#allocation4], %s2014
      %s2017 = sshll.u32 [#allocation10], 4
      %s2018 = int_to_ptr.vmem [resolvable:$true] %s2017
      %2020 = dma.vmem_to_hbm [thread:$0]  %s2018, 16, %s4, [#allocation4]
    $region37: #{tpu_custom_call.1} parent=1 // pred_fallthru
      _
    // Predicated region
    $region38: #{tpu_custom_call.1} parent=1 // pred_check
      _
    $region39: #{tpu_custom_call.1} parent=1 // pred_check_branch
      %2022 = sbr.rel (0) target = $region41
    $region40: #{tpu_custom_call.1} parent=1 // pred_region
      %2023 = dma.done [#allocation4], 16
    $region41: #{tpu_custom_call.1} parent=1 // pred_fallthru
      _
    %2024 = vsyncpa [#allocation3], 1
    %2025 = vsyncpa [#allocation7], 1
    %2026 = vsyncpa [#allocation4], 1
    %2027 = vsyncpa [#allocation5], 1

</llo_original>
